<compile_context>
chip_gen: v7x
topology: tpu7x:2x2x1
jax: 0.10.0
libtpu: 0.0.40
codegen_flags: <defaults>
</compile_context>

<pallas_src>
import jax
import jax.numpy as jnp
from jax.experimental import pallas as pl
from jax.experimental.pallas import tpu as pltpu


def _round_up(x, m):
    return (x + m - 1) // m * m


def lstm_seq_kernel(x_ref, wih_ref, bias_ref, whh_ref, hseq_ref,
                    h_sc, c_sc, xp_sc):
    """One T-tile of the LSTM recurrence.

    x_ref:    (T_tile, Bp, I)   raw inputs for this tile (zero-padded rows/steps)
    wih_ref:  (I, 4*Hp)         gate-padded W_ih^T (f32)
    bias_ref: (1, 4*Hp)         gate-padded b_ih + b_hh (f32)
    whh_ref:  (Hp, 4*Hp)        gate-padded W_hh^T (bf16, zero rows beyond H)
    hseq_ref: (T_tile, Bp, Hp)  output hidden states for this tile
    h_sc, c_sc: (Bp, Hp)        f32 carry, persistent across grid steps
    xp_sc:    (T_tile, Bp, 4*Hp) per-tile input projection scratch
    """
    t_tile, bp, i_dim = x_ref.shape
    hp = hseq_ref.shape[-1]

    @pl.when(pl.program_id(0) == 0)
    def _():
        h_sc[...] = jnp.zeros_like(h_sc)
        c_sc[...] = jnp.zeros_like(c_sc)

    # Input projection for the whole tile — elementwise/VPU work, off the serial
    # recurrence chain.  With I=1 this is a single broadcast multiply.
    x_blk = x_ref[...]                                        # (T_tile, Bp, I)
    w_ih = wih_ref[...]                                       # (I, 4*Hp)
    xproj = x_blk[:, :, 0:1] * w_ih[0:1, :].reshape(1, 1, 4 * hp)
    for i in range(1, i_dim):                                 # static tiny loop
        xproj = xproj + x_blk[:, :, i:i + 1] * w_ih[i:i + 1, :].reshape(1, 1, 4 * hp)
    xp_sc[...] = xproj + bias_ref[...].reshape(1, 1, 4 * hp)

    def step(t, carry):
        h, c = carry
        # Only the recurrent matmul is on the per-step critical path.  Run it in
        # bf16 (one MXU pass) with f32 accumulation, and read W_hh from VMEM here
        # rather than holding a 64-vreg value resident across the unrolled loop.
        gates = xp_sc[t] + jnp.dot(h.astype(jnp.bfloat16), whh_ref[...],
                                   preferred_element_type=jnp.float32)
        # PyTorch gate order: input, forget, cell(g), output — lane-aligned slices.
        i_g = jax.nn.sigmoid(gates[:, 0 * hp:1 * hp])
        f_g = jax.nn.sigmoid(gates[:, 1 * hp:2 * hp])
        g_g = jnp.tanh(gates[:, 2 * hp:3 * hp])
        c_new = f_g * c + i_g * g_g
        o_g = jax.nn.sigmoid(gates[:, 3 * hp:4 * hp])         # overlaps tanh(c_new)
        h_new = o_g * jnp.tanh(c_new)
        hseq_ref[t] = h_new
        return (h_new, c_new)

    h, c = jax.lax.fori_loop(0, t_tile, step, (h_sc[...], c_sc[...]), unroll=True)
    h_sc[...] = h
    c_sc[...] = c


def _pad_gate_axis(a, H, Hp):
    """(..., 4H) -> (..., 4Hp): gate block g moves to columns [g*Hp, g*Hp+H), rest 0."""
    pad = [(0, 0)] * (a.ndim - 1) + [(0, Hp - H)]
    parts = [jnp.pad(a[..., g * H:(g + 1) * H], pad) for g in range(4)]
    return jnp.concatenate(parts, axis=-1)


def simple_lstm_forward(x, params, t_tile=32):
    """x: (B, T, I) float32 -> (B, T, 1) float32 (matches PyTorch Simple_LSTM)."""
    B, T, I = x.shape
    H = params["w_hh"].shape[0] // 4
    Bp = _round_up(B, 8)              # full sublanes
    Hp = _round_up(H, 128)            # full lanes per gate
    f32 = jnp.float32
    hi = jax.lax.Precision.HIGHEST

    t_tile = max(1, min(t_tile, T))
    T_pad = _round_up(T, t_tile)
    n_tiles = T_pad // t_tile

    # Raw inputs, time-major, zero-padded (padded steps/rows are discarded below;
    # batch rows are independent so padding cannot contaminate real rows).
    x_t = jnp.transpose(x.astype(f32), (1, 0, 2))             # (T, B, I)
    x_t = jnp.pad(x_t, ((0, T_pad - T), (0, Bp - B), (0, 0))) # (T_pad, Bp, I)

    # Gate-padded parameters.  Padded lanes/rows MUST stay exactly zero: this is
    # what keeps the padded lanes of h/c at 0 through the recurrence.
    b = (params["b_ih"] + params["b_hh"]).astype(f32).reshape(1, 4 * H)
    b_p = _pad_gate_axis(b, H, Hp)                             # (1, 4Hp)
    w_ih_p = _pad_gate_axis(params["w_ih"].T.astype(f32), H, Hp)   # (I, 4Hp)
    w_hh_t = params["w_hh"].T.astype(f32)                      # (H, 4H)
    w_hh_p = jnp.pad(_pad_gate_axis(w_hh_t, H, Hp), ((0, Hp - H), (0, 0)))
    w_hh_p = w_hh_p.astype(jnp.bfloat16)                       # bf16 MXU operand

    h_seq = pl.pallas_call(
        lstm_seq_kernel,
        out_shape=jax.ShapeDtypeStruct((T_pad, Bp, Hp), f32),
        grid=(n_tiles,),
        in_specs=[
            pl.BlockSpec((t_tile, Bp, I), lambda i: (i, 0, 0)),   # x tile (streamed)
            pl.BlockSpec((I, 4 * Hp), lambda i: (0, 0)),          # W_ih^T (resident)
            pl.BlockSpec((1, 4 * Hp), lambda i: (0, 0)),          # fused bias
            pl.BlockSpec((Hp, 4 * Hp), lambda i: (0, 0)),         # W_hh^T (resident)
        ],
        out_specs=pl.BlockSpec((t_tile, Bp, Hp), lambda i: (i, 0, 0)),
        scratch_shapes=[
            pltpu.VMEM((Bp, Hp), f32),               # h carry (persists over grid)
            pltpu.VMEM((Bp, Hp), f32),               # c carry
            pltpu.VMEM((t_tile, Bp, 4 * Hp), f32),   # per-tile input projection
        ],
        compiler_params=pltpu.CompilerParams(
            dimension_semantics=("arbitrary",)),     # sequential recurrence
    )(x_t, w_ih_p, b_p, w_hh_p)

    # Final Linear(H -> 1) on the lane-dense hidden slab (wrapper-side).
    h_seq = h_seq[:T, :B, :H]                                  # (T, B, H)
    y = jnp.einsum("tbh,oh->tbo", h_seq, params["w_lin"].astype(f32),
                   precision=hi) + params["b_lin"].astype(f32) # (T, B, 1)
    return jnp.transpose(y, (1, 0, 2))                         # (B, T, 1)


def reference_forward(x, params):
    """Pure-JAX reference (matches PyTorch LSTM + Linear semantics)."""
    H = params["w_hh"].shape[0] // 4
    w_ih, w_hh = params["w_ih"], params["w_hh"]
    b = params["b_ih"] + params["b_hh"]
    B = x.shape[0]
    hi = jax.lax.Precision.HIGHEST

    def step(carry, x_t):
        h, c = carry
        gates = (jnp.dot(x_t, w_ih.T, precision=hi)
                 + jnp.dot(h, w_hh.T, precision=hi) + b)
        i = jax.nn.sigmoid(gates[:, 0 * H:1 * H])
        f = jax.nn.sigmoid(gates[:, 1 * H:2 * H])
        g = jnp.tanh(gates[:, 2 * H:3 * H])
        o = jax.nn.sigmoid(gates[:, 3 * H:4 * H])
        c = f * c + i * g
        h = o * jnp.tanh(c)
        return (h, c), h

    x_tm = jnp.transpose(x, (1, 0, 2))                          # (T, B, I)
    init = (jnp.zeros((B, H), jnp.float32), jnp.zeros((B, H), jnp.float32))
    _, hs = jax.lax.scan(step, init, x_tm)                      # (T, B, H)
    y = jnp.dot(hs, params["w_lin"].T, precision=hi) + params["b_lin"]
    return jnp.transpose(y, (1, 0, 2))


def init_params(key, input_size=1, hidden_size=50):
    """Deterministic init matching PyTorch shapes (uniform +-1/sqrt(H))."""
    H, I = hidden_size, input_size
    bound = 1.0 / jnp.sqrt(jnp.float32(H))
    ks = jax.random.split(key, 6)
    u = lambda k, shape: jax.random.uniform(k, shape, jnp.float32, -bound, bound)
    return {
        "w_ih": u(ks[0], (4 * H, I)),     # weight_ih_l0
        "w_hh": u(ks[1], (4 * H, H)),     # weight_hh_l0
        "b_ih": u(ks[2], (4 * H,)),       # bias_ih_l0
        "b_hh": u(ks[3], (4 * H,)),       # bias_hh_l0
        "w_lin": u(ks[4], (1, H)),        # linear.weight
        "b_lin": u(ks[5], (1,)),          # linear.bias
    }


if __name__ == "__main__":
    key = jax.random.PRNGKey(0)
    k_param, k_x = jax.random.split(key)

    B, T, I, H = 4, 8, 1, 50
    params = init_params(k_param, input_size=I, hidden_size=H)
    x = jax.random.normal(k_x, (B, T, I), dtype=jnp.float32)

    # t_tile=4 -> grid=(2,): exercises the VMEM-scratch h/c carry across grid steps.
    y = simple_lstm_forward(x, params, t_tile=4)
    y = jax.block_until_ready(y)

    y_ref = jax.block_until_ready(reference_forward(x, params))
    assert y.shape == (B, T, 1)
    # bf16 recurrent matmul -> relaxed tolerance vs the f32 reference.
    assert jnp.allclose(y, y_ref, atol=2e-2, rtol=2e-2), "mismatch vs JAX reference"

    print("KERNEL_OK")
</pallas_src>

<mosaic_0001>
module attributes {stable_mosaic.version = 11 : i64} {
  func.func @lstm_seq_kernel(%arg0: i32, %arg1: memref<4x8x1xf32, #tpu.memory_space<vmem>>, %arg2: memref<1x512xf32, #tpu.memory_space<vmem>>, %arg3: memref<1x512xf32, #tpu.memory_space<vmem>>, %arg4: memref<128x512xbf16, #tpu.memory_space<vmem>>, %arg5: memref<4x8x128xf32, #tpu.memory_space<vmem>>, %arg6: memref<8x128xf32, #tpu.memory_space<vmem>>, %arg7: memref<8x128xf32, #tpu.memory_space<vmem>>, %arg8: memref<4x8x512xf32, #tpu.memory_space<vmem>>) attributes {dimension_semantics = [#tpu.dimension_semantics<arbitrary>], iteration_bounds = array<i64: 2>, scalar_prefetch = 0 : i64, scratch_operands = 3 : i64, tpu.core_type = #tpu.core_type<tc>, window_params = [{transform_indices = @transform_0, window_bounds = array<i64: 4, 8, 1>}, {pipeline_mode = #tpu.pipeline_mode<synchronous>, transform_indices = @transform_1, window_bounds = array<i64: 1, 512>}, {pipeline_mode = #tpu.pipeline_mode<synchronous>, transform_indices = @transform_2, window_bounds = array<i64: 1, 512>}, {pipeline_mode = #tpu.pipeline_mode<synchronous>, transform_indices = @transform_3, window_bounds = array<i64: 128, 512>}, {transform_indices = @transform_4, window_bounds = array<i64: 4, 8, 128>}]} {
    %c0_i32 = arith.constant 0 : i32
    %0 = arith.cmpi eq, %arg0, %c0_i32 : i32
    %1 = arith.extui %0 : i1 to i32
    %c0_i32_0 = arith.constant 0 : i32
    %2 = arith.cmpi ne, %1, %c0_i32_0 : i32
    scf.if %2 {
      %cst_58 = arith.constant 0.000000e+00 : f32
      %162 = vector.broadcast %cst_58 : f32 to vector<8x128xf32>
      %c0_59 = arith.constant 0 : index
      %c0_60 = arith.constant 0 : index
      %163 = vector.load %arg6[%c0_59, %c0_60] : memref<8x128xf32, #tpu.memory_space<vmem>>, vector<8x128xf32>
      tpu.vector_store %arg6[%c0_59, %c0_60], %162 {strides = array<i32>} : memref<8x128xf32, #tpu.memory_space<vmem>>, vector<8x128xf32>,
      %cst_61 = arith.constant 0.000000e+00 : f32
      %164 = vector.broadcast %cst_61 : f32 to vector<8x128xf32>
      %c0_62 = arith.constant 0 : index
      %c0_63 = arith.constant 0 : index
      %165 = vector.load %arg7[%c0_62, %c0_63] : memref<8x128xf32, #tpu.memory_space<vmem>>, vector<8x128xf32>
      tpu.vector_store %arg7[%c0_62, %c0_63], %164 {strides = array<i32>} : memref<8x128xf32, #tpu.memory_space<vmem>>, vector<8x128xf32>,
    } else {
    }
    %c0 = arith.constant 0 : index
    %c0_1 = arith.constant 0 : index
    %c0_2 = arith.constant 0 : index
    %3 = vector.load %arg1[%c0, %c0_1, %c0_2] : memref<4x8x1xf32, #tpu.memory_space<vmem>>, vector<4x8x1xf32>
    %c0_3 = arith.constant 0 : index
    %c0_4 = arith.constant 0 : index
    %4 = vector.load %arg2[%c0_3, %c0_4] : memref<1x512xf32, #tpu.memory_space<vmem>>, vector<1x512xf32>
    %5 = vector.shape_cast %4 : vector<1x512xf32> to vector<1x1x512xf32>
    %6 = vector.broadcast %3 : vector<4x8x1xf32> to vector<4x8x512xf32>
    %7 = vector.broadcast %5 : vector<1x1x512xf32> to vector<4x8x512xf32>
    %8 = arith.mulf %6, %7 : vector<4x8x512xf32>
    %c0_5 = arith.constant 0 : index
    %c0_6 = arith.constant 0 : index
    %9 = vector.load %arg3[%c0_5, %c0_6] : memref<1x512xf32, #tpu.memory_space<vmem>>, vector<1x512xf32>
    %10 = vector.shape_cast %9 : vector<1x512xf32> to vector<1x1x512xf32>
    %11 = vector.broadcast %10 : vector<1x1x512xf32> to vector<4x8x512xf32>
    %12 = arith.addf %8, %11 : vector<4x8x512xf32>
    %c0_7 = arith.constant 0 : index
    %c0_8 = arith.constant 0 : index
    %c0_9 = arith.constant 0 : index
    %13 = vector.load %arg8[%c0_7, %c0_8, %c0_9] : memref<4x8x512xf32, #tpu.memory_space<vmem>>, vector<4x8x512xf32>
    tpu.vector_store %arg8[%c0_7, %c0_8, %c0_9], %12 {strides = array<i32>} : memref<4x8x512xf32, #tpu.memory_space<vmem>>, vector<4x8x512xf32>,
    %c0_10 = arith.constant 0 : index
    %c0_11 = arith.constant 0 : index
    %14 = vector.load %arg6[%c0_10, %c0_11] : memref<8x128xf32, #tpu.memory_space<vmem>>, vector<8x128xf32>
    %c0_12 = arith.constant 0 : index
    %c0_13 = arith.constant 0 : index
    %15 = vector.load %arg7[%c0_12, %c0_13] : memref<8x128xf32, #tpu.memory_space<vmem>>, vector<8x128xf32>
    %c0_i32_14 = arith.constant 0 : i32
    %16 = arith.index_cast %c0_i32_14 : i32 to index
    %c0_15 = arith.constant 0 : index
    %c0_16 = arith.constant 0 : index
    %17 = vector.load %arg8[%16, %c0_15, %c0_16] : memref<4x8x512xf32, #tpu.memory_space<vmem>>, vector<1x8x512xf32>
    %18 = vector.shape_cast %17 : vector<1x8x512xf32> to vector<8x512xf32>
    %19 = arith.truncf %14 : vector<8x128xf32> to vector<8x128xbf16>
    %c0_17 = arith.constant 0 : index
    %c0_18 = arith.constant 0 : index
    %20 = vector.load %arg4[%c0_17, %c0_18] : memref<128x512xbf16, #tpu.memory_space<vmem>>, vector<128x512xbf16>
    %cst = arith.constant dense<0.000000e+00> : vector<8x512xf32>
    %21 = tpu.matmul %19, %20, %cst {dimension_numbers = #tpu.dot_dimension_numbers<[1], [0], [0], [1], [0, 0, 1, 1], [], []>} : vector<8x128xbf16>, vector<128x512xbf16>, vector<8x512xf32> -> vector<8x512xf32>
    %22 = arith.addf %18, %21 : vector<8x512xf32>
    %23 = vector.extract_strided_slice %22 {offsets = [0, 0], sizes = [8, 128], strides = [1, 1]} : vector<8x512xf32> to vector<8x128xf32>
    %24 = arith.negf %23 : vector<8x128xf32>
    %25 = math.exp %24 : vector<8x128xf32>
    %cst_19 = arith.constant 1.000000e+00 : f32
    %26 = vector.broadcast %cst_19 : f32 to vector<8x128xf32>
    %27 = arith.addf %26, %25 : vector<8x128xf32>
    %28 = arith.divf %26, %27 : vector<8x128xf32>
    %29 = vector.extract_strided_slice %22 {offsets = [0, 128], sizes = [8, 128], strides = [1, 1]} : vector<8x512xf32> to vector<8x128xf32>
    %30 = arith.negf %29 : vector<8x128xf32>
    %31 = math.exp %30 : vector<8x128xf32>
    %cst_20 = arith.constant 1.000000e+00 : f32
    %32 = vector.broadcast %cst_20 : f32 to vector<8x128xf32>
    %33 = arith.addf %32, %31 : vector<8x128xf32>
    %34 = arith.divf %32, %33 : vector<8x128xf32>
    %35 = vector.extract_strided_slice %22 {offsets = [0, 256], sizes = [8, 128], strides = [1, 1]} : vector<8x512xf32> to vector<8x128xf32>
    %36 = math.tanh %35 : vector<8x128xf32>
    %37 = arith.mulf %34, %15 : vector<8x128xf32>
    %38 = arith.mulf %28, %36 : vector<8x128xf32>
    %39 = arith.addf %37, %38 : vector<8x128xf32>
    %40 = vector.extract_strided_slice %22 {offsets = [0, 384], sizes = [8, 128], strides = [1, 1]} : vector<8x512xf32> to vector<8x128xf32>
    %41 = arith.negf %40 : vector<8x128xf32>
    %42 = math.exp %41 : vector<8x128xf32>
    %cst_21 = arith.constant 1.000000e+00 : f32
    %43 = vector.broadcast %cst_21 : f32 to vector<8x128xf32>
    %44 = arith.addf %43, %42 : vector<8x128xf32>
    %45 = arith.divf %43, %44 : vector<8x128xf32>
    %46 = math.tanh %39 : vector<8x128xf32>
    %47 = arith.mulf %45, %46 : vector<8x128xf32>
    %48 = arith.index_cast %c0_i32_14 : i32 to index
    %c0_22 = arith.constant 0 : index
    %c0_23 = arith.constant 0 : index
    %49 = vector.load %arg5[%48, %c0_22, %c0_23] : memref<4x8x128xf32, #tpu.memory_space<vmem>>, vector<1x8x128xf32>
    %50 = vector.shape_cast %49 : vector<1x8x128xf32> to vector<8x128xf32>
    %51 = vector.shape_cast %47 : vector<8x128xf32> to vector<1x8x128xf32>
    tpu.vector_store %arg5[%48, %c0_22, %c0_23], %51 {strides = array<i32>} : memref<4x8x128xf32, #tpu.memory_space<vmem>>, vector<1x8x128xf32>,
    %c1_i32 = arith.constant 1 : i32
    %52 = arith.index_cast %c1_i32 : i32 to index
    %c0_24 = arith.constant 0 : index
    %c0_25 = arith.constant 0 : index
    %53 = vector.load %arg8[%52, %c0_24, %c0_25] : memref<4x8x512xf32, #tpu.memory_space<vmem>>, vector<1x8x512xf32>
    %54 = vector.shape_cast %53 : vector<1x8x512xf32> to vector<8x512xf32>
    %55 = arith.truncf %47 : vector<8x128xf32> to vector<8x128xbf16>
    %c0_26 = arith.constant 0 : index
    %c0_27 = arith.constant 0 : index
    %56 = vector.load %arg4[%c0_26, %c0_27] : memref<128x512xbf16, #tpu.memory_space<vmem>>, vector<128x512xbf16>
    %cst_28 = arith.constant dense<0.000000e+00> : vector<8x512xf32>
    %57 = tpu.matmul %55, %56, %cst_28 {dimension_numbers = #tpu.dot_dimension_numbers<[1], [0], [0], [1], [0, 0, 1, 1], [], []>} : vector<8x128xbf16>, vector<128x512xbf16>, vector<8x512xf32> -> vector<8x512xf32>
    %58 = arith.addf %54, %57 : vector<8x512xf32>
    %59 = vector.extract_strided_slice %58 {offsets = [0, 0], sizes = [8, 128], strides = [1, 1]} : vector<8x512xf32> to vector<8x128xf32>
    %60 = arith.negf %59 : vector<8x128xf32>
    %61 = math.exp %60 : vector<8x128xf32>
    %cst_29 = arith.constant 1.000000e+00 : f32
    %62 = vector.broadcast %cst_29 : f32 to vector<8x128xf32>
    %63 = arith.addf %62, %61 : vector<8x128xf32>
    %64 = arith.divf %62, %63 : vector<8x128xf32>
    %65 = vector.extract_strided_slice %58 {offsets = [0, 128], sizes = [8, 128], strides = [1, 1]} : vector<8x512xf32> to vector<8x128xf32>
    %66 = arith.negf %65 : vector<8x128xf32>
    %67 = math.exp %66 : vector<8x128xf32>
    %cst_30 = arith.constant 1.000000e+00 : f32
    %68 = vector.broadcast %cst_30 : f32 to vector<8x128xf32>
    %69 = arith.addf %68, %67 : vector<8x128xf32>
    %70 = arith.divf %68, %69 : vector<8x128xf32>
    %71 = vector.extract_strided_slice %58 {offsets = [0, 256], sizes = [8, 128], strides = [1, 1]} : vector<8x512xf32> to vector<8x128xf32>
    %72 = math.tanh %71 : vector<8x128xf32>
    %73 = arith.mulf %70, %39 : vector<8x128xf32>
    %74 = arith.mulf %64, %72 : vector<8x128xf32>
    %75 = arith.addf %73, %74 : vector<8x128xf32>
    %76 = vector.extract_strided_slice %58 {offsets = [0, 384], sizes = [8, 128], strides = [1, 1]} : vector<8x512xf32> to vector<8x128xf32>
    %77 = arith.negf %76 : vector<8x128xf32>
    %78 = math.exp %77 : vector<8x128xf32>
    %cst_31 = arith.constant 1.000000e+00 : f32
    %79 = vector.broadcast %cst_31 : f32 to vector<8x128xf32>
    %80 = arith.addf %79, %78 : vector<8x128xf32>
    %81 = arith.divf %79, %80 : vector<8x128xf32>
    %82 = math.tanh %75 : vector<8x128xf32>
    %83 = arith.mulf %81, %82 : vector<8x128xf32>
    %84 = arith.index_cast %c1_i32 : i32 to index
    %c0_32 = arith.constant 0 : index
    %c0_33 = arith.constant 0 : index
    %85 = vector.load %arg5[%84, %c0_32, %c0_33] : memref<4x8x128xf32, #tpu.memory_space<vmem>>, vector<1x8x128xf32>
    %86 = vector.shape_cast %85 : vector<1x8x128xf32> to vector<8x128xf32>
    %87 = vector.shape_cast %83 : vector<8x128xf32> to vector<1x8x128xf32>
    tpu.vector_store %arg5[%84, %c0_32, %c0_33], %87 {strides = array<i32>} : memref<4x8x128xf32, #tpu.memory_space<vmem>>, vector<1x8x128xf32>,
    %c2_i32 = arith.constant 2 : i32
    %88 = arith.index_cast %c2_i32 : i32 to index
    %c0_34 = arith.constant 0 : index
    %c0_35 = arith.constant 0 : index
    %89 = vector.load %arg8[%88, %c0_34, %c0_35] : memref<4x8x512xf32, #tpu.memory_space<vmem>>, vector<1x8x512xf32>
    %90 = vector.shape_cast %89 : vector<1x8x512xf32> to vector<8x512xf32>
    %91 = arith.truncf %83 : vector<8x128xf32> to vector<8x128xbf16>
    %c0_36 = arith.constant 0 : index
    %c0_37 = arith.constant 0 : index
    %92 = vector.load %arg4[%c0_36, %c0_37] : memref<128x512xbf16, #tpu.memory_space<vmem>>, vector<128x512xbf16>
    %cst_38 = arith.constant dense<0.000000e+00> : vector<8x512xf32>
    %93 = tpu.matmul %91, %92, %cst_38 {dimension_numbers = #tpu.dot_dimension_numbers<[1], [0], [0], [1], [0, 0, 1, 1], [], []>} : vector<8x128xbf16>, vector<128x512xbf16>, vector<8x512xf32> -> vector<8x512xf32>
    %94 = arith.addf %90, %93 : vector<8x512xf32>
    %95 = vector.extract_strided_slice %94 {offsets = [0, 0], sizes = [8, 128], strides = [1, 1]} : vector<8x512xf32> to vector<8x128xf32>
    %96 = arith.negf %95 : vector<8x128xf32>
    %97 = math.exp %96 : vector<8x128xf32>
    %cst_39 = arith.constant 1.000000e+00 : f32
    %98 = vector.broadcast %cst_39 : f32 to vector<8x128xf32>
    %99 = arith.addf %98, %97 : vector<8x128xf32>
    %100 = arith.divf %98, %99 : vector<8x128xf32>
    %101 = vector.extract_strided_slice %94 {offsets = [0, 128], sizes = [8, 128], strides = [1, 1]} : vector<8x512xf32> to vector<8x128xf32>
    %102 = arith.negf %101 : vector<8x128xf32>
    %103 = math.exp %102 : vector<8x128xf32>
    %cst_40 = arith.constant 1.000000e+00 : f32
    %104 = vector.broadcast %cst_40 : f32 to vector<8x128xf32>
    %105 = arith.addf %104, %103 : vector<8x128xf32>
    %106 = arith.divf %104, %105 : vector<8x128xf32>
    %107 = vector.extract_strided_slice %94 {offsets = [0, 256], sizes = [8, 128], strides = [1, 1]} : vector<8x512xf32> to vector<8x128xf32>
    %108 = math.tanh %107 : vector<8x128xf32>
    %109 = arith.mulf %106, %75 : vector<8x128xf32>
    %110 = arith.mulf %100, %108 : vector<8x128xf32>
    %111 = arith.addf %109, %110 : vector<8x128xf32>
    %112 = vector.extract_strided_slice %94 {offsets = [0, 384], sizes = [8, 128], strides = [1, 1]} : vector<8x512xf32> to vector<8x128xf32>
    %113 = arith.negf %112 : vector<8x128xf32>
    %114 = math.exp %113 : vector<8x128xf32>
    %cst_41 = arith.constant 1.000000e+00 : f32
    %115 = vector.broadcast %cst_41 : f32 to vector<8x128xf32>
    %116 = arith.addf %115, %114 : vector<8x128xf32>
    %117 = arith.divf %115, %116 : vector<8x128xf32>
    %118 = math.tanh %111 : vector<8x128xf32>
    %119 = arith.mulf %117, %118 : vector<8x128xf32>
    %120 = arith.index_cast %c2_i32 : i32 to index
    %c0_42 = arith.constant 0 : index
    %c0_43 = arith.constant 0 : index
    %121 = vector.load %arg5[%120, %c0_42, %c0_43] : memref<4x8x128xf32, #tpu.memory_space<vmem>>, vector<1x8x128xf32>
    %122 = vector.shape_cast %121 : vector<1x8x128xf32> to vector<8x128xf32>
    %123 = vector.shape_cast %119 : vector<8x128xf32> to vector<1x8x128xf32>
    tpu.vector_store %arg5[%120, %c0_42, %c0_43], %123 {strides = array<i32>} : memref<4x8x128xf32, #tpu.memory_space<vmem>>, vector<1x8x128xf32>,
    %c3_i32 = arith.constant 3 : i32
    %124 = arith.index_cast %c3_i32 : i32 to index
    %c0_44 = arith.constant 0 : index
    %c0_45 = arith.constant 0 : index
    %125 = vector.load %arg8[%124, %c0_44, %c0_45] : memref<4x8x512xf32, #tpu.memory_space<vmem>>, vector<1x8x512xf32>
    %126 = vector.shape_cast %125 : vector<1x8x512xf32> to vector<8x512xf32>
    %127 = arith.truncf %119 : vector<8x128xf32> to vector<8x128xbf16>
    %c0_46 = arith.constant 0 : index
    %c0_47 = arith.constant 0 : index
    %128 = vector.load %arg4[%c0_46, %c0_47] : memref<128x512xbf16, #tpu.memory_space<vmem>>, vector<128x512xbf16>
    %cst_48 = arith.constant dense<0.000000e+00> : vector<8x512xf32>
    %129 = tpu.matmul %127, %128, %cst_48 {dimension_numbers = #tpu.dot_dimension_numbers<[1], [0], [0], [1], [0, 0, 1, 1], [], []>} : vector<8x128xbf16>, vector<128x512xbf16>, vector<8x512xf32> -> vector<8x512xf32>
    %130 = arith.addf %126, %129 : vector<8x512xf32>
    %131 = vector.extract_strided_slice %130 {offsets = [0, 0], sizes = [8, 128], strides = [1, 1]} : vector<8x512xf32> to vector<8x128xf32>
    %132 = arith.negf %131 : vector<8x128xf32>
    %133 = math.exp %132 : vector<8x128xf32>
    %cst_49 = arith.constant 1.000000e+00 : f32
    %134 = vector.broadcast %cst_49 : f32 to vector<8x128xf32>
    %135 = arith.addf %134, %133 : vector<8x128xf32>
    %136 = arith.divf %134, %135 : vector<8x128xf32>
    %137 = vector.extract_strided_slice %130 {offsets = [0, 128], sizes = [8, 128], strides = [1, 1]} : vector<8x512xf32> to vector<8x128xf32>
    %138 = arith.negf %137 : vector<8x128xf32>
    %139 = math.exp %138 : vector<8x128xf32>
    %cst_50 = arith.constant 1.000000e+00 : f32
    %140 = vector.broadcast %cst_50 : f32 to vector<8x128xf32>
    %141 = arith.addf %140, %139 : vector<8x128xf32>
    %142 = arith.divf %140, %141 : vector<8x128xf32>
    %143 = vector.extract_strided_slice %130 {offsets = [0, 256], sizes = [8, 128], strides = [1, 1]} : vector<8x512xf32> to vector<8x128xf32>
    %144 = math.tanh %143 : vector<8x128xf32>
    %145 = arith.mulf %142, %111 : vector<8x128xf32>
    %146 = arith.mulf %136, %144 : vector<8x128xf32>
    %147 = arith.addf %145, %146 : vector<8x128xf32>
    %148 = vector.extract_strided_slice %130 {offsets = [0, 384], sizes = [8, 128], strides = [1, 1]} : vector<8x512xf32> to vector<8x128xf32>
    %149 = arith.negf %148 : vector<8x128xf32>
    %150 = math.exp %149 : vector<8x128xf32>
    %cst_51 = arith.constant 1.000000e+00 : f32
    %151 = vector.broadcast %cst_51 : f32 to vector<8x128xf32>
    %152 = arith.addf %151, %150 : vector<8x128xf32>
    %153 = arith.divf %151, %152 : vector<8x128xf32>
    %154 = math.tanh %147 : vector<8x128xf32>
    %155 = arith.mulf %153, %154 : vector<8x128xf32>
    %156 = arith.index_cast %c3_i32 : i32 to index
    %c0_52 = arith.constant 0 : index
    %c0_53 = arith.constant 0 : index
    %157 = vector.load %arg5[%156, %c0_52, %c0_53] : memref<4x8x128xf32, #tpu.memory_space<vmem>>, vector<1x8x128xf32>
    %158 = vector.shape_cast %157 : vector<1x8x128xf32> to vector<8x128xf32>
    %159 = vector.shape_cast %155 : vector<8x128xf32> to vector<1x8x128xf32>
    tpu.vector_store %arg5[%156, %c0_52, %c0_53], %159 {strides = array<i32>} : memref<4x8x128xf32, #tpu.memory_space<vmem>>, vector<1x8x128xf32>,
    %c4_i32 = arith.constant 4 : i32
    %c0_54 = arith.constant 0 : index
    %c0_55 = arith.constant 0 : index
    %160 = vector.load %arg6[%c0_54, %c0_55] : memref<8x128xf32, #tpu.memory_space<vmem>>, vector<8x128xf32>
    tpu.vector_store %arg6[%c0_54, %c0_55], %155 {strides = array<i32>} : memref<8x128xf32, #tpu.memory_space<vmem>>, vector<8x128xf32>,
    %c0_56 = arith.constant 0 : index
    %c0_57 = arith.constant 0 : index
    %161 = vector.load %arg7[%c0_56, %c0_57] : memref<8x128xf32, #tpu.memory_space<vmem>>, vector<8x128xf32>
    tpu.vector_store %arg7[%c0_56, %c0_57], %147 {strides = array<i32>} : memref<8x128xf32, #tpu.memory_space<vmem>>, vector<8x128xf32>,
    return
  }
  func.func @transform_0(%arg0: i32) -> (i32, i32, i32) {
    %c0_i32 = arith.constant 0 : i32
    %c0_i32_0 = arith.constant 0 : i32
    %c0_i32_1 = arith.constant 0 : i32
    return %arg0, %c0_i32, %c0_i32_0 : i32, i32, i32
  }
  func.func @transform_1(%arg0: i32) -> (i32, i32) {
    %c0_i32 = arith.constant 0 : i32
    %c0_i32_0 = arith.constant 0 : i32
    %c0_i32_1 = arith.constant 0 : i32
    return %c0_i32, %c0_i32_0 : i32, i32
  }
  func.func @transform_2(%arg0: i32) -> (i32, i32) {
    %c0_i32 = arith.constant 0 : i32
    %c0_i32_0 = arith.constant 0 : i32
    %c0_i32_1 = arith.constant 0 : i32
    return %c0_i32, %c0_i32_0 : i32, i32
  }
  func.func @transform_3(%arg0: i32) -> (i32, i32) {
    %c0_i32 = arith.constant 0 : i32
    %c0_i32_0 = arith.constant 0 : i32
    %c0_i32_1 = arith.constant 0 : i32
    return %c0_i32, %c0_i32_0 : i32, i32
  }
  func.func @transform_4(%arg0: i32) -> (i32, i32, i32) {
    %c0_i32 = arith.constant 0 : i32
    %c0_i32_0 = arith.constant 0 : i32
    %c0_i32_1 = arith.constant 0 : i32
    return %arg0, %c0_i32, %c0_i32_0 : i32, i32, i32
  }
}

</mosaic_0001>

<llo_original>
// kernel: tpu_custom_call.1
$region0: #{tpu_custom_call.1}
  #allocation0 [shape = 'u32[]', space=smem, size = 0x4, offset = 0x4, fixed_abs, tag = 'smem constant byte address 0x4 - core index']
  #allocation1 [shape = 'u32[144,128]{1,0:T(1,128)}', space=vmem, size = 0x12000, scoped, tag = 'internal scratch']
  #allocation2 [shape = 'f32[8,128]{1,0:T(8,128)}', space=vmem, size = 0x1000, scoped, tag = 'scratch operand']
  #allocation3 [shape = 'f32[8,128]{1,0:T(8,128)}', space=vmem, size = 0x1000, scoped, tag = 'scratch operand']
  #allocation4 [shape = 'f32[4,8,512]{2,1,0:T(8,128)}', space=vmem, size = 0x10000, scoped, tag = 'scratch operand']
  %s0 = inlined_call_operand.vmem [shape: f32[8,8,1], index: 0, kind: input, shape index: {}]
  %s1 = inlined_call_operand.vmem [shape: f32[1,512], index: 1, kind: input, shape index: {}]
  %s2 = inlined_call_operand.vmem [shape: f32[1,512], index: 2, kind: input, shape index: {}]
  %s3 = inlined_call_operand.hbm [shape: bf16[128,512], index: 3, kind: input, shape index: {}]
  %s4 = inlined_call_operand.hbm [shape: f32[8,8,128], index: 4, kind: output, shape index: {}]
  %s5 = sld [smem:[#allocation0]]
  $region57: #{tpu_custom_call.1} parent=0
    _
  %s7 = ssub.s32 1, %s5
  %s8 = scalar_select 0, %s7, %s5
  $region1: #{tpu_custom_call.1} parent=0
    #allocation5 [shape = 'u8[131072]{0}', space=vmem, size = 0x20000, scoped, tag = 'input window, operand 3, single buffered']
    #allocation6 [shape = 's32[2]{0}', space=sflag, size = 0x8, scoped, tag = 'scoped memory for tpu_custom_call.1']
    #allocation7 [shape = 's32[2]{0}', space=sflag, size = 0x8, scoped, tag = 'scoped memory for tpu_custom_call.1']
    #allocation8 [shape = 'u8[32768]{0}', space=vmem, size = 0x8000, scoped, tag = 'output window, operand 0']
    %9 = vsyncpa [#allocation6], 0
    %10 = vsyncpa [#allocation7], 0
    %s11 = scalar_lea.sflag [#allocation7], 1
    %12 = vsyncpa %s11, 0
    loop: start=0, step=1, limit=4
    $region2: #{tpu_custom_call.1} parent=1 // loop_pre_header
      _
    $region3: #{tpu_custom_call.1} parent=1 // loop_header
      %s14 = sphi 0, %s18
      %p15 = scmp.ge.s32.totalorder %s14, 4
      %s24 = sphi 0, %s26
      %s27 = sphi 0, %s24
      %s28 = sphi 0, %s27
      %s44 = sphi 0, %s28
      %s48 = sphi 0, %s48
      %s50 = sphi 0, %s48
      %s51 = sphi 0, %s50
      %s65 = sphi 0, %s51
      %s69 = sphi 0, %s69
      %s71 = sphi 0, %s69
      %s72 = sphi 0, %s71
      %s86 = sphi 0, %s72
      %s90 = sphi 0, %s90
      %s92 = sphi 0, %s90
      %s93 = sphi 0, %s92
      %s107 = sphi 0, %s93
      %s113 = sphi 0, %s115
      %s116 = sphi 0, %s113
      %s117 = sphi 0, %s116
      %s133 = sphi 0, %s117
    $region4: #{tpu_custom_call.1} parent=1 // loop_header_branch
      %17 = sbr.rel (%p15) target = $region8
    $region5: #{tpu_custom_call.1} parent=1 // loop_body
      %s19 = ssub.s32 %s14, 1
      %s20 = ssub.s32 %s14, 2
      %s21 = sadd.s32 %s14, 1
      %s22 = ssub.s32 %s14, %s21
      %p23 = scmp.eq.s32.totalorder %s22, 0
      %s25 = sadd.s32 %s24, 1
      %s26 = scalar_select %p23, %s24, %s25
      %p29 = pneg %p23
      %p30 = scmp.eq.s32.totalorder %s14, 1
      %p31 = por %p29, %p30
      %p32 = scmp.ne.s32.totalorder %s24, %s27
      %p33 = scmp.eq.s32.totalorder %s14, 0
      %p34 = por %p32, %p33
      %p35 = scmp.ne.s32.totalorder %s24, %s27
      %p36 = scmp.eq.s32.totalorder %s19, 1
      %p37 = por %p35, %p36
      %p38 = scmp.ne.s32.totalorder %s27, %s28
      %p39 = scmp.eq.s32.totalorder %s19, 0
      %p40 = por %p38, %p39
      %p41 = scmp.ne.s32.totalorder %s27, %s28
      %p42 = scmp.eq.s32.totalorder %s20, 1
      %p43 = por %p41, %p42
      %p45 = scmp.ne.s32.totalorder %s28, %s44
      %p46 = scmp.eq.s32.totalorder %s20, 0
      %p47 = por %p45, %p46
      %s49 = sadd.s32 %s48, 1
      %p52 = scmp.eq.s32.totalorder %s14, 1
      %p53 = scmp.ne.s32.totalorder %s48, %s50
      %p54 = scmp.eq.s32.totalorder %s14, 0
      %p55 = por %p53, %p54
      %p56 = scmp.ne.s32.totalorder %s48, %s50
      %p57 = scmp.eq.s32.totalorder %s19, 1
      %p58 = por %p56, %p57
      %p59 = scmp.ne.s32.totalorder %s50, %s51
      %p60 = scmp.eq.s32.totalorder %s19, 0
      %p61 = por %p59, %p60
      %p62 = scmp.ne.s32.totalorder %s50, %s51
      %p63 = scmp.eq.s32.totalorder %s20, 1
      %p64 = por %p62, %p63
      %p66 = scmp.ne.s32.totalorder %s51, %s65
      %p67 = scmp.eq.s32.totalorder %s20, 0
      %p68 = por %p66, %p67
      %s70 = sadd.s32 %s69, 1
      %p73 = scmp.eq.s32.totalorder %s14, 1
      %p74 = scmp.ne.s32.totalorder %s69, %s71
      %p75 = scmp.eq.s32.totalorder %s14, 0
      %p76 = por %p74, %p75
      %p77 = scmp.ne.s32.totalorder %s69, %s71
      %p78 = scmp.eq.s32.totalorder %s19, 1
      %p79 = por %p77, %p78
      %p80 = scmp.ne.s32.totalorder %s71, %s72
      %p81 = scmp.eq.s32.totalorder %s19, 0
      %p82 = por %p80, %p81
      %p83 = scmp.ne.s32.totalorder %s71, %s72
      %p84 = scmp.eq.s32.totalorder %s20, 1
      %p85 = por %p83, %p84
      %p87 = scmp.ne.s32.totalorder %s72, %s86
      %p88 = scmp.eq.s32.totalorder %s20, 0
      %p89 = por %p87, %p88
      %s91 = sadd.s32 %s90, 1
      %p94 = scmp.eq.s32.totalorder %s14, 1
      %p95 = scmp.ne.s32.totalorder %s90, %s92
      %p96 = scmp.eq.s32.totalorder %s14, 0
      %p97 = por %p95, %p96
      %p98 = scmp.ne.s32.totalorder %s90, %s92
      %p99 = scmp.eq.s32.totalorder %s19, 1
      %p100 = por %p98, %p99
      %p101 = scmp.ne.s32.totalorder %s92, %s93
      %p102 = scmp.eq.s32.totalorder %s19, 0
      %p103 = por %p101, %p102
      %p104 = scmp.ne.s32.totalorder %s92, %s93
      %p105 = scmp.eq.s32.totalorder %s20, 1
      %p106 = por %p104, %p105
      %p108 = scmp.ne.s32.totalorder %s93, %s107
      %p109 = scmp.eq.s32.totalorder %s20, 0
      %p110 = por %p108, %p109
      %s111 = ssub.s32 %s14, %s21
      %p112 = scmp.eq.s32.totalorder %s111, 0
      %s114 = sadd.s32 %s113, 1
      %s115 = scalar_select %p112, %s113, %s114
      %p118 = pneg %p112
      %p119 = scmp.eq.s32.totalorder %s14, 1
      %p120 = por %p118, %p119
      %p121 = scmp.ne.s32.totalorder %s113, %s116
      %p122 = scmp.eq.s32.totalorder %s14, 0
      %p123 = por %p121, %p122
      %p124 = scmp.ne.s32.totalorder %s113, %s116
      %p125 = scmp.eq.s32.totalorder %s19, 1
      %p126 = por %p124, %p125
      %p127 = scmp.ne.s32.totalorder %s116, %s117
      %p128 = scmp.eq.s32.totalorder %s19, 0
      %p129 = por %p127, %p128
      %p130 = scmp.ne.s32.totalorder %s116, %s117
      %p131 = scmp.eq.s32.totalorder %s20, 1
      %p132 = por %p130, %p131
      %p134 = scmp.ne.s32.totalorder %s117, %s133
      %p135 = scmp.eq.s32.totalorder %s20, 0
      %p136 = por %p134, %p135
      %p137 = scmp.le.s32.totalorder 1, %s14
      %p138 = scmp.lt.s32.totalorder %s14, 3
      %p139 = pnand %p137, %p138
      %p140 = pneg %p139
      // Predicated region
      $region9: #{tpu_custom_call.1} parent=5 // pred_check
        _
      $region10: #{tpu_custom_call.1} parent=5 // pred_check_branch
        %142 = sbr.rel (%p139) target = $region12
      $region11: #{tpu_custom_call.1} parent=5 // pred_region
        %s143 = ssub.s32 %s14, 1
        // Predicated region
        $region13: #{tpu_custom_call.1} parent=11 // pred_check
          %p144 = pneg %p61
        $region14: #{tpu_custom_call.1} parent=11 // pred_check_branch
          %146 = sbr.rel (%p144) target = $region16
        $region15: #{tpu_custom_call.1} parent=11 // pred_region
          _
        $region16: #{tpu_custom_call.1} parent=11 // pred_fallthru
          _
        // Predicated region
        $region17: #{tpu_custom_call.1} parent=11 // pred_check
          %p147 = pneg %p82
        $region18: #{tpu_custom_call.1} parent=11 // pred_check_branch
          %149 = sbr.rel (%p147) target = $region20
        $region19: #{tpu_custom_call.1} parent=11 // pred_region
          _
        $region20: #{tpu_custom_call.1} parent=11 // pred_fallthru
          _
        // Predicated region
        $region21: #{tpu_custom_call.1} parent=11 // pred_check
          %p150 = pneg %p103
        $region22: #{tpu_custom_call.1} parent=11 // pred_check_branch
          %152 = sbr.rel (%p150) target = $region24
        $region23: #{tpu_custom_call.1} parent=11 // pred_region
          %s154 = ssub.s32 4096, 4096
          %155 = vsyncadd [#allocation6], %s154
          %s156 = sshll.u32 [#allocation5], 4
          %s157 = int_to_ptr.vmem [resolvable:$true] %s156
          %162 = dma.hbm_to_vmem [thread:$0]  %s3, 4096, %s157, [#allocation6], 256, 256, 16
        $region24: #{tpu_custom_call.1} parent=11 // pred_fallthru
          _
      $region12: #{tpu_custom_call.1} parent=5 // pred_fallthru
        _
      %p163 = scmp.lt.s32.totalorder %s14, 2
      // Predicated region
      $region25: #{tpu_custom_call.1} parent=5 // pred_check
        %p164 = pneg %p163
      $region26: #{tpu_custom_call.1} parent=5 // pred_check_branch
        %166 = sbr.rel (%p164) target = $region28
      $region27: #{tpu_custom_call.1} parent=5 // pred_region
        // Predicated region
        $region29: #{tpu_custom_call.1} parent=27 // pred_check
          %p167 = pneg %p34
        $region30: #{tpu_custom_call.1} parent=27 // pred_check_branch
          %169 = sbr.rel (%p167) target = $region32
        $region31: #{tpu_custom_call.1} parent=27 // pred_region
          %s170 = smul.u32 4, %s14
          %p171 = scmp.lt.s32.totalorder %s170, 7
          %s172 = scalar_select %p171, %s170, 7
          %s173 = smul.addr %s172, 8
          %s174 = scalar_lea.vmem %s0, %s173
          %s175 = smul.u32 4, %s14
        $region32: #{tpu_custom_call.1} parent=27 // pred_fallthru
          _
      $region28: #{tpu_custom_call.1} parent=5 // pred_fallthru
        _
      %p176 = scmp.le.s32.totalorder 1, %s14
      %p177 = scmp.lt.s32.totalorder %s14, 3
      %p178 = pnand %p176, %p177
      %p179 = pneg %p178
      // Predicated region
      $region33: #{tpu_custom_call.1} parent=5 // pred_check
        _
      $region34: #{tpu_custom_call.1} parent=5 // pred_check_branch
        %181 = sbr.rel (%p178) target = $region36
      $region35: #{tpu_custom_call.1} parent=5 // pred_region
        %s182 = ssub.s32 %s14, 1
        // Predicated region
        $region37: #{tpu_custom_call.1} parent=35 // pred_check
          %p183 = pneg %p103
        $region38: #{tpu_custom_call.1} parent=35 // pred_check_branch
          %185 = sbr.rel (%p183) target = $region40
        $region39: #{tpu_custom_call.1} parent=35 // pred_region
          %186 = dma.done [#allocation6], 4096
        $region40: #{tpu_custom_call.1} parent=35 // pred_fallthru
          _
        %s187 = smul.u32 4, %s19
        %p188 = scmp.lt.s32.totalorder %s187, 7
        %s189 = scalar_select %p188, %s187, 7
        %s190 = smul.addr %s189, 8
        %s191 = scalar_lea.vmem %s0, %s190
        %p192 = pneg %p40
        %p193 = pneg %p37
        %p194 = pneg %p61
        %p195 = pneg %p58
        %p196 = pneg %p82
        %p197 = pneg %p79
        %p198 = pneg %p103
        %p199 = pneg %p100
        %p200 = pneg %p129
        %p201 = pneg %p126
        %s202 = sand.u32 %s116, 1
        %s203 = scalar_lea.sflag [#allocation7], %s202
        %s204 = sand.u32 %s116, 1
        %s205 = smul.addr %s204, 32
        %s206 = scalar_lea.vmem [#allocation8], %s205
        %s207 = smul.u32 4, %s19
        %p208 = scmp.lt.s32.totalorder %s207, 7
        %s209 = scalar_select %p208, %s207, 7
        %s210 = smul.addr %s209, 8
        %s211 = scalar_lea.vmem %s0, %s210
        %s212 = smul.u32 4, %s19
        %s213 = smul.u32 4, %s19
        %p215 = scmp.eq.s32.totalorder %s19, 0
        // Predicated region
        $region41: #{tpu_custom_call.1} parent=35 // pred_check
          %p216 = pneg %p215
        $region42: #{tpu_custom_call.1} parent=35 // pred_check_branch
          %218 = sbr.rel (%p216) target = $region44
        $region43: #{tpu_custom_call.1} parent=35 // pred_region
          %219 = vst [vmem:[#allocation2] sm:$0xff] 0.0
          %220 = vst [vmem:[#allocation3] sm:$0xff] 0.0
        $region44: #{tpu_custom_call.1} parent=35 // pred_fallthru
          _
        %v221 = vld [vmem:[%s211] sm:$0xff]
        %v222 = vld [vmem:[%s211 + $0x8] sm:$0xff]
        %v223 = vld [vmem:[%s211 + $0x10] sm:$0xff]
        %v224 = vld [vmem:[%s211 + $0x18] sm:$0xff]
        %v225 = vld [vmem:[%s1] sm:$0xf]
        %227 = vset.pattern.permute.xlu0 0
        %228 = vperm.xlu0 %227, %v221
        %v229 = vpop.permute.xlu0 %228
        %232 = vset.pattern.permute.xlu0 0
        %233 = vperm.xlu0 %232, %v222
        %v234 = vpop.permute.xlu0 %233
        %237 = vset.pattern.permute.xlu0 0
        %238 = vperm.xlu0 %237, %v223
        %v239 = vpop.permute.xlu0 %238
        %242 = vset.pattern.permute.xlu0 0
        %243 = vperm.xlu0 %242, %v224
        %v244 = vpop.permute.xlu0 %243
        %v247 = vlaneseq
        %v248 = vshrl.u32 %v247, 7
        %v249 = vsub.s32 0, %v248
        %v250 = vrot.slane %v225, %v249
        %v251 = vlaneseq
        %v252 = vshrl.u32 %v251, 7
        %v253 = vsub.s32 1, %v252
        %v254 = vrot.slane %v225, %v253
        %v255 = vlaneseq
        %v256 = vshrl.u32 %v255, 7
        %v257 = vsub.s32 2, %v256
        %v258 = vrot.slane %v225, %v257
        %v259 = vlaneseq
        %v260 = vshrl.u32 %v259, 7
        %v261 = vsub.s32 3, %v260
        %v262 = vrot.slane %v225, %v261
        %v267 = vmul.f32 %v229, %v250
        %v268 = vmul.f32 %v229, %v254
        %v269 = vmul.f32 %v229, %v258
        %v270 = vmul.f32 %v229, %v262
        %v271 = vmul.f32 %v234, %v250
        %v272 = vmul.f32 %v234, %v254
        %v273 = vmul.f32 %v234, %v258
        %v274 = vmul.f32 %v234, %v262
        %v275 = vmul.f32 %v239, %v250
        %v276 = vmul.f32 %v239, %v254
        %v277 = vmul.f32 %v239, %v258
        %v278 = vmul.f32 %v239, %v262
        %v279 = vmul.f32 %v244, %v250
        %v280 = vmul.f32 %v244, %v254
        %v281 = vmul.f32 %v244, %v258
        %v282 = vmul.f32 %v244, %v262
        %v283 = vld [vmem:[%s2] sm:$0xf]
        %v285 = vlaneseq
        %v286 = vshrl.u32 %v285, 7
        %v287 = vsub.s32 0, %v286
        %v288 = vrot.slane %v283, %v287
        %v289 = vlaneseq
        %v290 = vshrl.u32 %v289, 7
        %v291 = vsub.s32 1, %v290
        %v292 = vrot.slane %v283, %v291
        %v293 = vlaneseq
        %v294 = vshrl.u32 %v293, 7
        %v295 = vsub.s32 2, %v294
        %v296 = vrot.slane %v283, %v295
        %v297 = vlaneseq
        %v298 = vshrl.u32 %v297, 7
        %v299 = vsub.s32 3, %v298
        %v300 = vrot.slane %v283, %v299
        %v305 = vadd.f32 %v267, %v288
        %v306 = vadd.f32 %v268, %v292
        %v307 = vadd.f32 %v269, %v296
        %v308 = vadd.f32 %v270, %v300
        %v309 = vadd.f32 %v271, %v288
        %v310 = vadd.f32 %v272, %v292
        %v311 = vadd.f32 %v273, %v296
        %v312 = vadd.f32 %v274, %v300
        %v313 = vadd.f32 %v275, %v288
        %v314 = vadd.f32 %v276, %v292
        %v315 = vadd.f32 %v277, %v296
        %v316 = vadd.f32 %v278, %v300
        %v317 = vadd.f32 %v279, %v288
        %v318 = vadd.f32 %v280, %v292
        %v319 = vadd.f32 %v281, %v296
        %v320 = vadd.f32 %v282, %v300
        %321 = vst [vmem:[#allocation4] sm:$0xff] %v305
        %322 = vst [vmem:[#allocation4 + $0x8] sm:$0xff] %v306
        %323 = vst [vmem:[#allocation4 + $0x10] sm:$0xff] %v307
        %324 = vst [vmem:[#allocation4 + $0x18] sm:$0xff] %v308
        %325 = vst [vmem:[#allocation4 + $0x20] sm:$0xff] %v309
        %326 = vst [vmem:[#allocation4 + $0x28] sm:$0xff] %v310
        %327 = vst [vmem:[#allocation4 + $0x30] sm:$0xff] %v311
        %328 = vst [vmem:[#allocation4 + $0x38] sm:$0xff] %v312
        %329 = vst [vmem:[#allocation4 + $0x40] sm:$0xff] %v313
        %330 = vst [vmem:[#allocation4 + $0x48] sm:$0xff] %v314
        %331 = vst [vmem:[#allocation4 + $0x50] sm:$0xff] %v315
        %332 = vst [vmem:[#allocation4 + $0x58] sm:$0xff] %v316
        %333 = vst [vmem:[#allocation4 + $0x60] sm:$0xff] %v317
        %334 = vst [vmem:[#allocation4 + $0x68] sm:$0xff] %v318
        %335 = vst [vmem:[#allocation4 + $0x70] sm:$0xff] %v319
        %336 = vst [vmem:[#allocation4 + $0x78] sm:$0xff] %v320
        %v337 = vld [vmem:[#allocation2] sm:$0xff]
        %v338 = vld [vmem:[#allocation3] sm:$0xff]
        %v339 = vld [vmem:[#allocation4] sm:$0xff]
        %v340 = vld [vmem:[#allocation4 + $0x8] sm:$0xff]
        %v341 = vld [vmem:[#allocation4 + $0x10] sm:$0xff]
        %v342 = vld [vmem:[#allocation4 + $0x18] sm:$0xff]
        %v343 = vpack.c.bf16 %v337, %v337
        %v344 = vld [vmem:[#allocation5] sm:$0xff]
        %v345 = vld [vmem:[#allocation5 + $0x8] sm:$0xff]
        %v346 = vld [vmem:[#allocation5 + $0x10] sm:$0xff]
        %v347 = vld [vmem:[#allocation5 + $0x18] sm:$0xff]
        %v348 = vld [vmem:[#allocation5 + $0x20] sm:$0xff]
        %v349 = vld [vmem:[#allocation5 + $0x28] sm:$0xff]
        %v350 = vld [vmem:[#allocation5 + $0x30] sm:$0xff]
        %v351 = vld [vmem:[#allocation5 + $0x38] sm:$0xff]
        %v352 = vld [vmem:[#allocation5 + $0x40] sm:$0xff]
        %v353 = vld [vmem:[#allocation5 + $0x48] sm:$0xff]
        %v354 = vld [vmem:[#allocation5 + $0x50] sm:$0xff]
        %v355 = vld [vmem:[#allocation5 + $0x58] sm:$0xff]
        %v356 = vld [vmem:[#allocation5 + $0x60] sm:$0xff]
        %v357 = vld [vmem:[#allocation5 + $0x68] sm:$0xff]
        %v358 = vld [vmem:[#allocation5 + $0x70] sm:$0xff]
        %v359 = vld [vmem:[#allocation5 + $0x78] sm:$0xff]
        %v360 = vld [vmem:[#allocation5 + $0x80] sm:$0xff]
        %v361 = vld [vmem:[#allocation5 + $0x88] sm:$0xff]
        %v362 = vld [vmem:[#allocation5 + $0x90] sm:$0xff]
        %v363 = vld [vmem:[#allocation5 + $0x98] sm:$0xff]
        %v364 = vld [vmem:[#allocation5 + $0xa0] sm:$0xff]
        %v365 = vld [vmem:[#allocation5 + $0xa8] sm:$0xff]
        %v366 = vld [vmem:[#allocation5 + $0xb0] sm:$0xff]
        %v367 = vld [vmem:[#allocation5 + $0xb8] sm:$0xff]
        %v368 = vld [vmem:[#allocation5 + $0xc0] sm:$0xff]
        %v369 = vld [vmem:[#allocation5 + $0xc8] sm:$0xff]
        %v370 = vld [vmem:[#allocation5 + $0xd0] sm:$0xff]
        %v371 = vld [vmem:[#allocation5 + $0xd8] sm:$0xff]
        %v372 = vld [vmem:[#allocation5 + $0xe0] sm:$0xff]
        %v373 = vld [vmem:[#allocation5 + $0xe8] sm:$0xff]
        %v374 = vld [vmem:[#allocation5 + $0xf0] sm:$0xff]
        %v375 = vld [vmem:[#allocation5 + $0xf8] sm:$0xff]
        %v408 = vunpack.c.l.b16 %v344
        %v409 = vunpack.c.h.b16 %v344
        %v410 = vunpack.c.l.b16 %v345
        %v411 = vunpack.c.h.b16 %v345
        %v412 = vunpack.c.l.b16 %v346
        %v413 = vunpack.c.h.b16 %v346
        %v414 = vunpack.c.l.b16 %v347
        %v415 = vunpack.c.h.b16 %v347
        %v416 = vunpack.c.l.b16 %v348
        %v417 = vunpack.c.h.b16 %v348
        %v418 = vunpack.c.l.b16 %v349
        %v419 = vunpack.c.h.b16 %v349
        %v420 = vunpack.c.l.b16 %v350
        %v421 = vunpack.c.h.b16 %v350
        %v422 = vunpack.c.l.b16 %v351
        %v423 = vunpack.c.h.b16 %v351
        %v424 = vunpack.c.l.b16 %v352
        %v425 = vunpack.c.h.b16 %v352
        %v426 = vunpack.c.l.b16 %v353
        %v427 = vunpack.c.h.b16 %v353
        %v428 = vunpack.c.l.b16 %v354
        %v429 = vunpack.c.h.b16 %v354
        %v430 = vunpack.c.l.b16 %v355
        %v431 = vunpack.c.h.b16 %v355
        %v432 = vunpack.c.l.b16 %v356
        %v433 = vunpack.c.h.b16 %v356
        %v434 = vunpack.c.l.b16 %v357
        %v435 = vunpack.c.h.b16 %v357
        %v436 = vunpack.c.l.b16 %v358
        %v437 = vunpack.c.h.b16 %v358
        %v438 = vunpack.c.l.b16 %v359
        %v439 = vunpack.c.h.b16 %v359
        %v440 = vunpack.c.l.b16 %v360
        %v441 = vunpack.c.h.b16 %v360
        %v442 = vunpack.c.l.b16 %v361
        %v443 = vunpack.c.h.b16 %v361
        %v444 = vunpack.c.l.b16 %v362
        %v445 = vunpack.c.h.b16 %v362
        %v446 = vunpack.c.l.b16 %v363
        %v447 = vunpack.c.h.b16 %v363
        %v448 = vunpack.c.l.b16 %v364
        %v449 = vunpack.c.h.b16 %v364
        %v450 = vunpack.c.l.b16 %v365
        %v451 = vunpack.c.h.b16 %v365
        %v452 = vunpack.c.l.b16 %v366
        %v453 = vunpack.c.h.b16 %v366
        %v454 = vunpack.c.l.b16 %v367
        %v455 = vunpack.c.h.b16 %v367
        %v456 = vunpack.c.l.b16 %v368
        %v457 = vunpack.c.h.b16 %v368
        %v458 = vunpack.c.l.b16 %v369
        %v459 = vunpack.c.h.b16 %v369
        %v460 = vunpack.c.l.b16 %v370
        %v461 = vunpack.c.h.b16 %v370
        %v462 = vunpack.c.l.b16 %v371
        %v463 = vunpack.c.h.b16 %v371
        %v464 = vunpack.c.l.b16 %v372
        %v465 = vunpack.c.h.b16 %v372
        %v466 = vunpack.c.l.b16 %v373
        %v467 = vunpack.c.h.b16 %v373
        %v468 = vunpack.c.l.b16 %v374
        %v469 = vunpack.c.h.b16 %v374
        %v470 = vunpack.c.l.b16 %v375
        %v471 = vunpack.c.h.b16 %v375
        %v472 = vpack.c.b16 %v412, %v408
        %v473 = vpack.c.b16 %v413, %v409
        %v474 = vpack.c.b16 %v414, %v410
        %v475 = vpack.c.b16 %v415, %v411
        %v476 = vpack.c.b16 %v420, %v416
        %v477 = vpack.c.b16 %v421, %v417
        %v478 = vpack.c.b16 %v422, %v418
        %v479 = vpack.c.b16 %v423, %v419
        %v480 = vpack.c.b16 %v428, %v424
        %v481 = vpack.c.b16 %v429, %v425
        %v482 = vpack.c.b16 %v430, %v426
        %v483 = vpack.c.b16 %v431, %v427
        %v484 = vpack.c.b16 %v436, %v432
        %v485 = vpack.c.b16 %v437, %v433
        %v486 = vpack.c.b16 %v438, %v434
        %v487 = vpack.c.b16 %v439, %v435
        %v488 = vpack.c.b16 %v444, %v440
        %v489 = vpack.c.b16 %v445, %v441
        %v490 = vpack.c.b16 %v446, %v442
        %v491 = vpack.c.b16 %v447, %v443
        %v492 = vpack.c.b16 %v452, %v448
        %v493 = vpack.c.b16 %v453, %v449
        %v494 = vpack.c.b16 %v454, %v450
        %v495 = vpack.c.b16 %v455, %v451
        %v496 = vpack.c.b16 %v460, %v456
        %v497 = vpack.c.b16 %v461, %v457
        %v498 = vpack.c.b16 %v462, %v458
        %v499 = vpack.c.b16 %v463, %v459
        %v500 = vpack.c.b16 %v468, %v464
        %v501 = vpack.c.b16 %v469, %v465
        %v502 = vpack.c.b16 %v470, %v466
        %v503 = vpack.c.b16 %v471, %v467
        %536 = vmatprep.subr.bf16.mxu0 %v473
        %537 = vmatpush1.bf16.msra.mxu0 %v472
        %538 = vmatprep.subr.bf16.mxu0 %v477
        %539 = vmatpush1.bf16.msra.mxu0 %v476
        %540 = vmatprep.subr.bf16.mxu0 %v481
        %541 = vmatpush1.bf16.msra.mxu0 %v480
        %542 = vmatprep.subr.bf16.mxu0 %v485
        %543 = vmatpush1.bf16.msra.mxu0 %v484
        %544 = vmatprep.subr.bf16.mxu0 %v489
        %545 = vmatpush1.bf16.msra.mxu0 %v488
        %546 = vmatprep.subr.bf16.mxu0 %v493
        %547 = vmatpush1.bf16.msra.mxu0 %v492
        %548 = vmatprep.subr.bf16.mxu0 %v497
        %549 = vmatpush1.bf16.msra.mxu0 %v496
        %550 = vmatprep.subr.bf16.mxu0 %v501
        %551 = vmatpush1.bf16.msra.mxu0 %v500
        %552 = vmatprep.subr.bf16.mxu0 0
        %553 = vmatpush1.bf16.msra.mxu0 0
        %554 = vmatprep.subr.bf16.mxu0 0
        %555 = vmatpush1.bf16.msra.mxu0 0
        %556 = vmatprep.subr.bf16.mxu0 0
        %557 = vmatpush1.bf16.msra.mxu0 0
        %558 = vmatprep.subr.bf16.mxu0 0
        %559 = vmatpush1.bf16.msra.mxu0 0
        %560 = vmatprep.subr.bf16.mxu0 0
        %561 = vmatpush1.bf16.msra.mxu0 0
        %562 = vmatprep.subr.bf16.mxu0 0
        %563 = vmatpush1.bf16.msra.mxu0 0
        %564 = vmatprep.subr.bf16.mxu0 0
        %565 = vmatpush1.bf16.msra.mxu0 0
        %566 = vmatprep.subr.bf16.mxu0 0
        %567 = vmatpush1.bf16.msra.mxu0 0
        %568 = vmatprep.mubr.bf16.mxu0 0
        %569 = vmatmul.mubr.bf16.gmra.mrb[0].mxu0 %v343
        %v570 = vpop.f32.mrb[0].mxu0
        %v571 = vadd.f32 0.0, %v570
        %v572 = vpop.f32.mrb[0].mxu0
        %v573 = vadd.f32 0.0, %v572
        %v574 = vpop.f32.mrb[0].mxu0
        %v575 = vpop.f32.mrb[0].mxu0
        %576 = vdwg.mxu0
        %577 = vmatprep.subr.bf16.mxu0 %v475
        %578 = vmatpush1.bf16.msra.mxu0 %v474
        %579 = vmatprep.subr.bf16.mxu0 %v479
        %580 = vmatpush1.bf16.msra.mxu0 %v478
        %581 = vmatprep.subr.bf16.mxu0 %v483
        %582 = vmatpush1.bf16.msra.mxu0 %v482
        %583 = vmatprep.subr.bf16.mxu0 %v487
        %584 = vmatpush1.bf16.msra.mxu0 %v486
        %585 = vmatprep.subr.bf16.mxu0 %v491
        %586 = vmatpush1.bf16.msra.mxu0 %v490
        %587 = vmatprep.subr.bf16.mxu0 %v495
        %588 = vmatpush1.bf16.msra.mxu0 %v494
        %589 = vmatprep.subr.bf16.mxu0 %v499
        %590 = vmatpush1.bf16.msra.mxu0 %v498
        %591 = vmatprep.subr.bf16.mxu0 %v503
        %592 = vmatpush1.bf16.msra.mxu0 %v502
        %593 = vmatprep.subr.bf16.mxu0 0
        %594 = vmatpush1.bf16.msra.mxu0 0
        %595 = vmatprep.subr.bf16.mxu0 0
        %596 = vmatpush1.bf16.msra.mxu0 0
        %597 = vmatprep.subr.bf16.mxu0 0
        %598 = vmatpush1.bf16.msra.mxu0 0
        %599 = vmatprep.subr.bf16.mxu0 0
        %600 = vmatpush1.bf16.msra.mxu0 0
        %601 = vmatprep.subr.bf16.mxu0 0
        %602 = vmatpush1.bf16.msra.mxu0 0
        %603 = vmatprep.subr.bf16.mxu0 0
        %604 = vmatpush1.bf16.msra.mxu0 0
        %605 = vmatprep.subr.bf16.mxu0 0
        %606 = vmatpush1.bf16.msra.mxu0 0
        %607 = vmatprep.subr.bf16.mxu0 0
        %608 = vmatpush1.bf16.msra.mxu0 0
        %609 = vmatprep.mubr.bf16.mxu0 0
        %610 = vmatmul.mubr.bf16.gmra.mrb[0].mxu0 %v343
        %v611 = vpop.f32.mrb[0].mxu0
        %v612 = vadd.f32 0.0, %v611
        %v613 = vpop.f32.mrb[0].mxu0
        %v614 = vadd.f32 0.0, %v613
        %v615 = vpop.f32.mrb[0].mxu0
        %v616 = vpop.f32.mrb[0].mxu0
        %617 = vdwg.mxu0
        %v618 = vadd.f32 %v339, %v571
        %v619 = vadd.f32 %v340, %v573
        %v620 = vadd.f32 %v341, %v612
        %v621 = vadd.f32 %v342, %v614
        %v622 = vxor.u32 %v618, 2147483648
        %v623 = vmul.f32 %v622, 1.442695
        %v624 = vpow.pop %v623
        %v625 = vadd.f32 %v624, 1.0
        %v626 = vrcp.pop %v625
        %v627 = vmul.f32 1.0, %v626
        %v628 = vxor.u32 %v619, 2147483648
        %v629 = vmul.f32 %v628, 1.442695
        %v630 = vpow.pop %v629
        %v631 = vadd.f32 %v630, 1.0
        %v632 = vrcp.pop %v631
        %v633 = vmul.f32 1.0, %v632
        %v634 = vtanh.pop %v620
        %v635 = vmul.f32 %v633, %v338
        %v636 = vmul.f32 %v627, %v634
        %v637 = vadd.f32 %v635, %v636
        %v638 = vxor.u32 %v621, 2147483648
        %v639 = vmul.f32 %v638, 1.442695
        %v640 = vpow.pop %v639
        %v641 = vadd.f32 %v640, 1.0
        %v642 = vrcp.pop %v641
        %v643 = vmul.f32 1.0, %v642
        %v644 = vtanh.pop %v637
        %v645 = vmul.f32 %v643, %v644
        %646 = vst [vmem:[%s206] sm:$0xff] %v645
        %s647 = scalar_lea.vmem [#allocation4], 32
        %v648 = vld [vmem:[%s647] sm:$0xff]
        %v649 = vld [vmem:[%s647 + $0x8] sm:$0xff]
        %v650 = vld [vmem:[%s647 + $0x10] sm:$0xff]
        %v651 = vld [vmem:[%s647 + $0x18] sm:$0xff]
        %v652 = vpack.c.bf16 %v645, %v645
        %v653 = vld [vmem:[#allocation5] sm:$0xff]
        %v654 = vld [vmem:[#allocation5 + $0x8] sm:$0xff]
        %v655 = vld [vmem:[#allocation5 + $0x10] sm:$0xff]
        %v656 = vld [vmem:[#allocation5 + $0x18] sm:$0xff]
        %v657 = vld [vmem:[#allocation5 + $0x20] sm:$0xff]
        %v658 = vld [vmem:[#allocation5 + $0x28] sm:$0xff]
        %v659 = vld [vmem:[#allocation5 + $0x30] sm:$0xff]
        %v660 = vld [vmem:[#allocation5 + $0x38] sm:$0xff]
        %v661 = vld [vmem:[#allocation5 + $0x40] sm:$0xff]
        %v662 = vld [vmem:[#allocation5 + $0x48] sm:$0xff]
        %v663 = vld [vmem:[#allocation5 + $0x50] sm:$0xff]
        %v664 = vld [vmem:[#allocation5 + $0x58] sm:$0xff]
        %v665 = vld [vmem:[#allocation5 + $0x60] sm:$0xff]
        %v666 = vld [vmem:[#allocation5 + $0x68] sm:$0xff]
        %v667 = vld [vmem:[#allocation5 + $0x70] sm:$0xff]
        %v668 = vld [vmem:[#allocation5 + $0x78] sm:$0xff]
        %v669 = vld [vmem:[#allocation5 + $0x80] sm:$0xff]
        %v670 = vld [vmem:[#allocation5 + $0x88] sm:$0xff]
        %v671 = vld [vmem:[#allocation5 + $0x90] sm:$0xff]
        %v672 = vld [vmem:[#allocation5 + $0x98] sm:$0xff]
        %v673 = vld [vmem:[#allocation5 + $0xa0] sm:$0xff]
        %v674 = vld [vmem:[#allocation5 + $0xa8] sm:$0xff]
        %v675 = vld [vmem:[#allocation5 + $0xb0] sm:$0xff]
        %v676 = vld [vmem:[#allocation5 + $0xb8] sm:$0xff]
        %v677 = vld [vmem:[#allocation5 + $0xc0] sm:$0xff]
        %v678 = vld [vmem:[#allocation5 + $0xc8] sm:$0xff]
        %v679 = vld [vmem:[#allocation5 + $0xd0] sm:$0xff]
        %v680 = vld [vmem:[#allocation5 + $0xd8] sm:$0xff]
        %v681 = vld [vmem:[#allocation5 + $0xe0] sm:$0xff]
        %v682 = vld [vmem:[#allocation5 + $0xe8] sm:$0xff]
        %v683 = vld [vmem:[#allocation5 + $0xf0] sm:$0xff]
        %v684 = vld [vmem:[#allocation5 + $0xf8] sm:$0xff]
        %v717 = vunpack.c.l.b16 %v653
        %v718 = vunpack.c.h.b16 %v653
        %v719 = vunpack.c.l.b16 %v654
        %v720 = vunpack.c.h.b16 %v654
        %v721 = vunpack.c.l.b16 %v655
        %v722 = vunpack.c.h.b16 %v655
        %v723 = vunpack.c.l.b16 %v656
        %v724 = vunpack.c.h.b16 %v656
        %v725 = vunpack.c.l.b16 %v657
        %v726 = vunpack.c.h.b16 %v657
        %v727 = vunpack.c.l.b16 %v658
        %v728 = vunpack.c.h.b16 %v658
        %v729 = vunpack.c.l.b16 %v659
        %v730 = vunpack.c.h.b16 %v659
        %v731 = vunpack.c.l.b16 %v660
        %v732 = vunpack.c.h.b16 %v660
        %v733 = vunpack.c.l.b16 %v661
        %v734 = vunpack.c.h.b16 %v661
        %v735 = vunpack.c.l.b16 %v662
        %v736 = vunpack.c.h.b16 %v662
        %v737 = vunpack.c.l.b16 %v663
        %v738 = vunpack.c.h.b16 %v663
        %v739 = vunpack.c.l.b16 %v664
        %v740 = vunpack.c.h.b16 %v664
        %v741 = vunpack.c.l.b16 %v665
        %v742 = vunpack.c.h.b16 %v665
        %v743 = vunpack.c.l.b16 %v666
        %v744 = vunpack.c.h.b16 %v666
        %v745 = vunpack.c.l.b16 %v667
        %v746 = vunpack.c.h.b16 %v667
        %v747 = vunpack.c.l.b16 %v668
        %v748 = vunpack.c.h.b16 %v668
        %v749 = vunpack.c.l.b16 %v669
        %v750 = vunpack.c.h.b16 %v669
        %v751 = vunpack.c.l.b16 %v670
        %v752 = vunpack.c.h.b16 %v670
        %v753 = vunpack.c.l.b16 %v671
        %v754 = vunpack.c.h.b16 %v671
        %v755 = vunpack.c.l.b16 %v672
        %v756 = vunpack.c.h.b16 %v672
        %v757 = vunpack.c.l.b16 %v673
        %v758 = vunpack.c.h.b16 %v673
        %v759 = vunpack.c.l.b16 %v674
        %v760 = vunpack.c.h.b16 %v674
        %v761 = vunpack.c.l.b16 %v675
        %v762 = vunpack.c.h.b16 %v675
        %v763 = vunpack.c.l.b16 %v676
        %v764 = vunpack.c.h.b16 %v676
        %v765 = vunpack.c.l.b16 %v677
        %v766 = vunpack.c.h.b16 %v677
        %v767 = vunpack.c.l.b16 %v678
        %v768 = vunpack.c.h.b16 %v678
        %v769 = vunpack.c.l.b16 %v679
        %v770 = vunpack.c.h.b16 %v679
        %v771 = vunpack.c.l.b16 %v680
        %v772 = vunpack.c.h.b16 %v680
        %v773 = vunpack.c.l.b16 %v681
        %v774 = vunpack.c.h.b16 %v681
        %v775 = vunpack.c.l.b16 %v682
        %v776 = vunpack.c.h.b16 %v682
        %v777 = vunpack.c.l.b16 %v683
        %v778 = vunpack.c.h.b16 %v683
        %v779 = vunpack.c.l.b16 %v684
        %v780 = vunpack.c.h.b16 %v684
        %v781 = vpack.c.b16 %v721, %v717
        %v782 = vpack.c.b16 %v722, %v718
        %v783 = vpack.c.b16 %v723, %v719
        %v784 = vpack.c.b16 %v724, %v720
        %v785 = vpack.c.b16 %v729, %v725
        %v786 = vpack.c.b16 %v730, %v726
        %v787 = vpack.c.b16 %v731, %v727
        %v788 = vpack.c.b16 %v732, %v728
        %v789 = vpack.c.b16 %v737, %v733
        %v790 = vpack.c.b16 %v738, %v734
        %v791 = vpack.c.b16 %v739, %v735
        %v792 = vpack.c.b16 %v740, %v736
        %v793 = vpack.c.b16 %v745, %v741
        %v794 = vpack.c.b16 %v746, %v742
        %v795 = vpack.c.b16 %v747, %v743
        %v796 = vpack.c.b16 %v748, %v744
        %v797 = vpack.c.b16 %v753, %v749
        %v798 = vpack.c.b16 %v754, %v750
        %v799 = vpack.c.b16 %v755, %v751
        %v800 = vpack.c.b16 %v756, %v752
        %v801 = vpack.c.b16 %v761, %v757
        %v802 = vpack.c.b16 %v762, %v758
        %v803 = vpack.c.b16 %v763, %v759
        %v804 = vpack.c.b16 %v764, %v760
        %v805 = vpack.c.b16 %v769, %v765
        %v806 = vpack.c.b16 %v770, %v766
        %v807 = vpack.c.b16 %v771, %v767
        %v808 = vpack.c.b16 %v772, %v768
        %v809 = vpack.c.b16 %v777, %v773
        %v810 = vpack.c.b16 %v778, %v774
        %v811 = vpack.c.b16 %v779, %v775
        %v812 = vpack.c.b16 %v780, %v776
        %845 = vmatprep.subr.bf16.mxu0 %v782
        %846 = vmatpush1.bf16.msra.mxu0 %v781
        %847 = vmatprep.subr.bf16.mxu0 %v786
        %848 = vmatpush1.bf16.msra.mxu0 %v785
        %849 = vmatprep.subr.bf16.mxu0 %v790
        %850 = vmatpush1.bf16.msra.mxu0 %v789
        %851 = vmatprep.subr.bf16.mxu0 %v794
        %852 = vmatpush1.bf16.msra.mxu0 %v793
        %853 = vmatprep.subr.bf16.mxu0 %v798
        %854 = vmatpush1.bf16.msra.mxu0 %v797
        %855 = vmatprep.subr.bf16.mxu0 %v802
        %856 = vmatpush1.bf16.msra.mxu0 %v801
        %857 = vmatprep.subr.bf16.mxu0 %v806
        %858 = vmatpush1.bf16.msra.mxu0 %v805
        %859 = vmatprep.subr.bf16.mxu0 %v810
        %860 = vmatpush1.bf16.msra.mxu0 %v809
        %861 = vmatprep.subr.bf16.mxu0 0
        %862 = vmatpush1.bf16.msra.mxu0 0
        %863 = vmatprep.subr.bf16.mxu0 0
        %864 = vmatpush1.bf16.msra.mxu0 0
        %865 = vmatprep.subr.bf16.mxu0 0
        %866 = vmatpush1.bf16.msra.mxu0 0
        %867 = vmatprep.subr.bf16.mxu0 0
        %868 = vmatpush1.bf16.msra.mxu0 0
        %869 = vmatprep.subr.bf16.mxu0 0
        %870 = vmatpush1.bf16.msra.mxu0 0
        %871 = vmatprep.subr.bf16.mxu0 0
        %872 = vmatpush1.bf16.msra.mxu0 0
        %873 = vmatprep.subr.bf16.mxu0 0
        %874 = vmatpush1.bf16.msra.mxu0 0
        %875 = vmatprep.subr.bf16.mxu0 0
        %876 = vmatpush1.bf16.msra.mxu0 0
        %877 = vmatprep.mubr.bf16.mxu0 0
        %878 = vmatmul.mubr.bf16.gmra.mrb[0].mxu0 %v652
        %v879 = vpop.f32.mrb[0].mxu0
        %v880 = vadd.f32 0.0, %v879
        %v881 = vpop.f32.mrb[0].mxu0
        %v882 = vadd.f32 0.0, %v881
        %v883 = vpop.f32.mrb[0].mxu0
        %v884 = vpop.f32.mrb[0].mxu0
        %885 = vdwg.mxu0
        %886 = vmatprep.subr.bf16.mxu0 %v784
        %887 = vmatpush1.bf16.msra.mxu0 %v783
        %888 = vmatprep.subr.bf16.mxu0 %v788
        %889 = vmatpush1.bf16.msra.mxu0 %v787
        %890 = vmatprep.subr.bf16.mxu0 %v792
        %891 = vmatpush1.bf16.msra.mxu0 %v791
        %892 = vmatprep.subr.bf16.mxu0 %v796
        %893 = vmatpush1.bf16.msra.mxu0 %v795
        %894 = vmatprep.subr.bf16.mxu0 %v800
        %895 = vmatpush1.bf16.msra.mxu0 %v799
        %896 = vmatprep.subr.bf16.mxu0 %v804
        %897 = vmatpush1.bf16.msra.mxu0 %v803
        %898 = vmatprep.subr.bf16.mxu0 %v808
        %899 = vmatpush1.bf16.msra.mxu0 %v807
        %900 = vmatprep.subr.bf16.mxu0 %v812
        %901 = vmatpush1.bf16.msra.mxu0 %v811
        %902 = vmatprep.subr.bf16.mxu0 0
        %903 = vmatpush1.bf16.msra.mxu0 0
        %904 = vmatprep.subr.bf16.mxu0 0
        %905 = vmatpush1.bf16.msra.mxu0 0
        %906 = vmatprep.subr.bf16.mxu0 0
        %907 = vmatpush1.bf16.msra.mxu0 0
        %908 = vmatprep.subr.bf16.mxu0 0
        %909 = vmatpush1.bf16.msra.mxu0 0
        %910 = vmatprep.subr.bf16.mxu0 0
        %911 = vmatpush1.bf16.msra.mxu0 0
        %912 = vmatprep.subr.bf16.mxu0 0
        %913 = vmatpush1.bf16.msra.mxu0 0
        %914 = vmatprep.subr.bf16.mxu0 0
        %915 = vmatpush1.bf16.msra.mxu0 0
        %916 = vmatprep.subr.bf16.mxu0 0
        %917 = vmatpush1.bf16.msra.mxu0 0
        %918 = vmatprep.mubr.bf16.mxu0 0
        %919 = vmatmul.mubr.bf16.gmra.mrb[0].mxu0 %v652
        %v920 = vpop.f32.mrb[0].mxu0
        %v921 = vadd.f32 0.0, %v920
        %v922 = vpop.f32.mrb[0].mxu0
        %v923 = vadd.f32 0.0, %v922
        %v924 = vpop.f32.mrb[0].mxu0
        %v925 = vpop.f32.mrb[0].mxu0
        %926 = vdwg.mxu0
        %v927 = vadd.f32 %v648, %v880
        %v928 = vadd.f32 %v649, %v882
        %v929 = vadd.f32 %v650, %v921
        %v930 = vadd.f32 %v651, %v923
        %v931 = vxor.u32 %v927, 2147483648
        %v932 = vmul.f32 %v931, 1.442695
        %v933 = vpow.pop %v932
        %v934 = vadd.f32 %v933, 1.0
        %v935 = vrcp.pop %v934
        %v936 = vmul.f32 1.0, %v935
        %v937 = vxor.u32 %v928, 2147483648
        %v938 = vmul.f32 %v937, 1.442695
        %v939 = vpow.pop %v938
        %v940 = vadd.f32 %v939, 1.0
        %v941 = vrcp.pop %v940
        %v942 = vmul.f32 1.0, %v941
        %v943 = vtanh.pop %v929
        %v944 = vmul.f32 %v942, %v637
        %v945 = vmul.f32 %v936, %v943
        %v946 = vadd.f32 %v944, %v945
        %v947 = vxor.u32 %v930, 2147483648
        %v948 = vmul.f32 %v947, 1.442695
        %v949 = vpow.pop %v948
        %v950 = vadd.f32 %v949, 1.0
        %v951 = vrcp.pop %v950
        %v952 = vmul.f32 1.0, %v951
        %v953 = vtanh.pop %v946
        %v954 = vmul.f32 %v952, %v953
        %s955 = scalar_lea.vmem %s206, 8 [#allocation8]
        %956 = vst [vmem:[%s955] sm:$0xff] %v954
        %s957 = scalar_lea.vmem [#allocation4], 64
        %v958 = vld [vmem:[%s957] sm:$0xff]
        %v959 = vld [vmem:[%s957 + $0x8] sm:$0xff]
        %v960 = vld [vmem:[%s957 + $0x10] sm:$0xff]
        %v961 = vld [vmem:[%s957 + $0x18] sm:$0xff]
        %v962 = vpack.c.bf16 %v954, %v954
        %v963 = vld [vmem:[#allocation5] sm:$0xff]
        %v964 = vld [vmem:[#allocation5 + $0x8] sm:$0xff]
        %v965 = vld [vmem:[#allocation5 + $0x10] sm:$0xff]
        %v966 = vld [vmem:[#allocation5 + $0x18] sm:$0xff]
        %v967 = vld [vmem:[#allocation5 + $0x20] sm:$0xff]
        %v968 = vld [vmem:[#allocation5 + $0x28] sm:$0xff]
        %v969 = vld [vmem:[#allocation5 + $0x30] sm:$0xff]
        %v970 = vld [vmem:[#allocation5 + $0x38] sm:$0xff]
        %v971 = vld [vmem:[#allocation5 + $0x40] sm:$0xff]
        %v972 = vld [vmem:[#allocation5 + $0x48] sm:$0xff]
        %v973 = vld [vmem:[#allocation5 + $0x50] sm:$0xff]
        %v974 = vld [vmem:[#allocation5 + $0x58] sm:$0xff]
        %v975 = vld [vmem:[#allocation5 + $0x60] sm:$0xff]
        %v976 = vld [vmem:[#allocation5 + $0x68] sm:$0xff]
        %v977 = vld [vmem:[#allocation5 + $0x70] sm:$0xff]
        %v978 = vld [vmem:[#allocation5 + $0x78] sm:$0xff]
        %v979 = vld [vmem:[#allocation5 + $0x80] sm:$0xff]
        %v980 = vld [vmem:[#allocation5 + $0x88] sm:$0xff]
        %v981 = vld [vmem:[#allocation5 + $0x90] sm:$0xff]
        %v982 = vld [vmem:[#allocation5 + $0x98] sm:$0xff]
        %v983 = vld [vmem:[#allocation5 + $0xa0] sm:$0xff]
        %v984 = vld [vmem:[#allocation5 + $0xa8] sm:$0xff]
        %v985 = vld [vmem:[#allocation5 + $0xb0] sm:$0xff]
        %v986 = vld [vmem:[#allocation5 + $0xb8] sm:$0xff]
        %v987 = vld [vmem:[#allocation5 + $0xc0] sm:$0xff]
        %v988 = vld [vmem:[#allocation5 + $0xc8] sm:$0xff]
        %v989 = vld [vmem:[#allocation5 + $0xd0] sm:$0xff]
        %v990 = vld [vmem:[#allocation5 + $0xd8] sm:$0xff]
        %v991 = vld [vmem:[#allocation5 + $0xe0] sm:$0xff]
        %v992 = vld [vmem:[#allocation5 + $0xe8] sm:$0xff]
        %v993 = vld [vmem:[#allocation5 + $0xf0] sm:$0xff]
        %v994 = vld [vmem:[#allocation5 + $0xf8] sm:$0xff]
        %v1027 = vunpack.c.l.b16 %v963
        %v1028 = vunpack.c.h.b16 %v963
        %v1029 = vunpack.c.l.b16 %v964
        %v1030 = vunpack.c.h.b16 %v964
        %v1031 = vunpack.c.l.b16 %v965
        %v1032 = vunpack.c.h.b16 %v965
        %v1033 = vunpack.c.l.b16 %v966
        %v1034 = vunpack.c.h.b16 %v966
        %v1035 = vunpack.c.l.b16 %v967
        %v1036 = vunpack.c.h.b16 %v967
        %v1037 = vunpack.c.l.b16 %v968
        %v1038 = vunpack.c.h.b16 %v968
        %v1039 = vunpack.c.l.b16 %v969
        %v1040 = vunpack.c.h.b16 %v969
        %v1041 = vunpack.c.l.b16 %v970
        %v1042 = vunpack.c.h.b16 %v970
        %v1043 = vunpack.c.l.b16 %v971
        %v1044 = vunpack.c.h.b16 %v971
        %v1045 = vunpack.c.l.b16 %v972
        %v1046 = vunpack.c.h.b16 %v972
        %v1047 = vunpack.c.l.b16 %v973
        %v1048 = vunpack.c.h.b16 %v973
        %v1049 = vunpack.c.l.b16 %v974
        %v1050 = vunpack.c.h.b16 %v974
        %v1051 = vunpack.c.l.b16 %v975
        %v1052 = vunpack.c.h.b16 %v975
        %v1053 = vunpack.c.l.b16 %v976
        %v1054 = vunpack.c.h.b16 %v976
        %v1055 = vunpack.c.l.b16 %v977
        %v1056 = vunpack.c.h.b16 %v977
        %v1057 = vunpack.c.l.b16 %v978
        %v1058 = vunpack.c.h.b16 %v978
        %v1059 = vunpack.c.l.b16 %v979
        %v1060 = vunpack.c.h.b16 %v979
        %v1061 = vunpack.c.l.b16 %v980
        %v1062 = vunpack.c.h.b16 %v980
        %v1063 = vunpack.c.l.b16 %v981
        %v1064 = vunpack.c.h.b16 %v981
        %v1065 = vunpack.c.l.b16 %v982
        %v1066 = vunpack.c.h.b16 %v982
        %v1067 = vunpack.c.l.b16 %v983
        %v1068 = vunpack.c.h.b16 %v983
        %v1069 = vunpack.c.l.b16 %v984
        %v1070 = vunpack.c.h.b16 %v984
        %v1071 = vunpack.c.l.b16 %v985
        %v1072 = vunpack.c.h.b16 %v985
        %v1073 = vunpack.c.l.b16 %v986
        %v1074 = vunpack.c.h.b16 %v986
        %v1075 = vunpack.c.l.b16 %v987
        %v1076 = vunpack.c.h.b16 %v987
        %v1077 = vunpack.c.l.b16 %v988
        %v1078 = vunpack.c.h.b16 %v988
        %v1079 = vunpack.c.l.b16 %v989
        %v1080 = vunpack.c.h.b16 %v989
        %v1081 = vunpack.c.l.b16 %v990
        %v1082 = vunpack.c.h.b16 %v990
        %v1083 = vunpack.c.l.b16 %v991
        %v1084 = vunpack.c.h.b16 %v991
        %v1085 = vunpack.c.l.b16 %v992
        %v1086 = vunpack.c.h.b16 %v992
        %v1087 = vunpack.c.l.b16 %v993
        %v1088 = vunpack.c.h.b16 %v993
        %v1089 = vunpack.c.l.b16 %v994
        %v1090 = vunpack.c.h.b16 %v994
        %v1091 = vpack.c.b16 %v1031, %v1027
        %v1092 = vpack.c.b16 %v1032, %v1028
        %v1093 = vpack.c.b16 %v1033, %v1029
        %v1094 = vpack.c.b16 %v1034, %v1030
        %v1095 = vpack.c.b16 %v1039, %v1035
        %v1096 = vpack.c.b16 %v1040, %v1036
        %v1097 = vpack.c.b16 %v1041, %v1037
        %v1098 = vpack.c.b16 %v1042, %v1038
        %v1099 = vpack.c.b16 %v1047, %v1043
        %v1100 = vpack.c.b16 %v1048, %v1044
        %v1101 = vpack.c.b16 %v1049, %v1045
        %v1102 = vpack.c.b16 %v1050, %v1046
        %v1103 = vpack.c.b16 %v1055, %v1051
        %v1104 = vpack.c.b16 %v1056, %v1052
        %v1105 = vpack.c.b16 %v1057, %v1053
        %v1106 = vpack.c.b16 %v1058, %v1054
        %v1107 = vpack.c.b16 %v1063, %v1059
        %v1108 = vpack.c.b16 %v1064, %v1060
        %v1109 = vpack.c.b16 %v1065, %v1061
        %v1110 = vpack.c.b16 %v1066, %v1062
        %v1111 = vpack.c.b16 %v1071, %v1067
        %v1112 = vpack.c.b16 %v1072, %v1068
        %v1113 = vpack.c.b16 %v1073, %v1069
        %v1114 = vpack.c.b16 %v1074, %v1070
        %v1115 = vpack.c.b16 %v1079, %v1075
        %v1116 = vpack.c.b16 %v1080, %v1076
        %v1117 = vpack.c.b16 %v1081, %v1077
        %v1118 = vpack.c.b16 %v1082, %v1078
        %v1119 = vpack.c.b16 %v1087, %v1083
        %v1120 = vpack.c.b16 %v1088, %v1084
        %v1121 = vpack.c.b16 %v1089, %v1085
        %v1122 = vpack.c.b16 %v1090, %v1086
        %1155 = vmatprep.subr.bf16.mxu0 %v1092
        %1156 = vmatpush1.bf16.msra.mxu0 %v1091
        %1157 = vmatprep.subr.bf16.mxu0 %v1096
        %1158 = vmatpush1.bf16.msra.mxu0 %v1095
        %1159 = vmatprep.subr.bf16.mxu0 %v1100
        %1160 = vmatpush1.bf16.msra.mxu0 %v1099
        %1161 = vmatprep.subr.bf16.mxu0 %v1104
        %1162 = vmatpush1.bf16.msra.mxu0 %v1103
        %1163 = vmatprep.subr.bf16.mxu0 %v1108
        %1164 = vmatpush1.bf16.msra.mxu0 %v1107
        %1165 = vmatprep.subr.bf16.mxu0 %v1112
        %1166 = vmatpush1.bf16.msra.mxu0 %v1111
        %1167 = vmatprep.subr.bf16.mxu0 %v1116
        %1168 = vmatpush1.bf16.msra.mxu0 %v1115
        %1169 = vmatprep.subr.bf16.mxu0 %v1120
        %1170 = vmatpush1.bf16.msra.mxu0 %v1119
        %1171 = vmatprep.subr.bf16.mxu0 0
        %1172 = vmatpush1.bf16.msra.mxu0 0
        %1173 = vmatprep.subr.bf16.mxu0 0
        %1174 = vmatpush1.bf16.msra.mxu0 0
        %1175 = vmatprep.subr.bf16.mxu0 0
        %1176 = vmatpush1.bf16.msra.mxu0 0
        %1177 = vmatprep.subr.bf16.mxu0 0
        %1178 = vmatpush1.bf16.msra.mxu0 0
        %1179 = vmatprep.subr.bf16.mxu0 0
        %1180 = vmatpush1.bf16.msra.mxu0 0
        %1181 = vmatprep.subr.bf16.mxu0 0
        %1182 = vmatpush1.bf16.msra.mxu0 0
        %1183 = vmatprep.subr.bf16.mxu0 0
        %1184 = vmatpush1.bf16.msra.mxu0 0
        %1185 = vmatprep.subr.bf16.mxu0 0
        %1186 = vmatpush1.bf16.msra.mxu0 0
        %1187 = vmatprep.mubr.bf16.mxu0 0
        %1188 = vmatmul.mubr.bf16.gmra.mrb[0].mxu0 %v962
        %v1189 = vpop.f32.mrb[0].mxu0
        %v1190 = vadd.f32 0.0, %v1189
        %v1191 = vpop.f32.mrb[0].mxu0
        %v1192 = vadd.f32 0.0, %v1191
        %v1193 = vpop.f32.mrb[0].mxu0
        %v1194 = vpop.f32.mrb[0].mxu0
        %1195 = vdwg.mxu0
        %1196 = vmatprep.subr.bf16.mxu0 %v1094
        %1197 = vmatpush1.bf16.msra.mxu0 %v1093
        %1198 = vmatprep.subr.bf16.mxu0 %v1098
        %1199 = vmatpush1.bf16.msra.mxu0 %v1097
        %1200 = vmatprep.subr.bf16.mxu0 %v1102
        %1201 = vmatpush1.bf16.msra.mxu0 %v1101
        %1202 = vmatprep.subr.bf16.mxu0 %v1106
        %1203 = vmatpush1.bf16.msra.mxu0 %v1105
        %1204 = vmatprep.subr.bf16.mxu0 %v1110
        %1205 = vmatpush1.bf16.msra.mxu0 %v1109
        %1206 = vmatprep.subr.bf16.mxu0 %v1114
        %1207 = vmatpush1.bf16.msra.mxu0 %v1113
        %1208 = vmatprep.subr.bf16.mxu0 %v1118
        %1209 = vmatpush1.bf16.msra.mxu0 %v1117
        %1210 = vmatprep.subr.bf16.mxu0 %v1122
        %1211 = vmatpush1.bf16.msra.mxu0 %v1121
        %1212 = vmatprep.subr.bf16.mxu0 0
        %1213 = vmatpush1.bf16.msra.mxu0 0
        %1214 = vmatprep.subr.bf16.mxu0 0
        %1215 = vmatpush1.bf16.msra.mxu0 0
        %1216 = vmatprep.subr.bf16.mxu0 0
        %1217 = vmatpush1.bf16.msra.mxu0 0
        %1218 = vmatprep.subr.bf16.mxu0 0
        %1219 = vmatpush1.bf16.msra.mxu0 0
        %1220 = vmatprep.subr.bf16.mxu0 0
        %1221 = vmatpush1.bf16.msra.mxu0 0
        %1222 = vmatprep.subr.bf16.mxu0 0
        %1223 = vmatpush1.bf16.msra.mxu0 0
        %1224 = vmatprep.subr.bf16.mxu0 0
        %1225 = vmatpush1.bf16.msra.mxu0 0
        %1226 = vmatprep.subr.bf16.mxu0 0
        %1227 = vmatpush1.bf16.msra.mxu0 0
        %1228 = vmatprep.mubr.bf16.mxu0 0
        %1229 = vmatmul.mubr.bf16.gmra.mrb[0].mxu0 %v962
        %v1230 = vpop.f32.mrb[0].mxu0
        %v1231 = vadd.f32 0.0, %v1230
        %v1232 = vpop.f32.mrb[0].mxu0
        %v1233 = vadd.f32 0.0, %v1232
        %v1234 = vpop.f32.mrb[0].mxu0
        %v1235 = vpop.f32.mrb[0].mxu0
        %1236 = vdwg.mxu0
        %v1237 = vadd.f32 %v958, %v1190
        %v1238 = vadd.f32 %v959, %v1192
        %v1239 = vadd.f32 %v960, %v1231
        %v1240 = vadd.f32 %v961, %v1233
        %v1241 = vxor.u32 %v1237, 2147483648
        %v1242 = vmul.f32 %v1241, 1.442695
        %v1243 = vpow.pop %v1242
        %v1244 = vadd.f32 %v1243, 1.0
        %v1245 = vrcp.pop %v1244
        %v1246 = vmul.f32 1.0, %v1245
        %v1247 = vxor.u32 %v1238, 2147483648
        %v1248 = vmul.f32 %v1247, 1.442695
        %v1249 = vpow.pop %v1248
        %v1250 = vadd.f32 %v1249, 1.0
        %v1251 = vrcp.pop %v1250
        %v1252 = vmul.f32 1.0, %v1251
        %v1253 = vtanh.pop %v1239
        %v1254 = vmul.f32 %v1252, %v946
        %v1255 = vmul.f32 %v1246, %v1253
        %v1256 = vadd.f32 %v1254, %v1255
        %v1257 = vxor.u32 %v1240, 2147483648
        %v1258 = vmul.f32 %v1257, 1.442695
        %v1259 = vpow.pop %v1258
        %v1260 = vadd.f32 %v1259, 1.0
        %v1261 = vrcp.pop %v1260
        %v1262 = vmul.f32 1.0, %v1261
        %v1263 = vtanh.pop %v1256
        %v1264 = vmul.f32 %v1262, %v1263
        %s1265 = scalar_lea.vmem %s206, 16 [#allocation8]
        %1266 = vst [vmem:[%s1265] sm:$0xff] %v1264
        %s1267 = scalar_lea.vmem [#allocation4], 96
        %v1268 = vld [vmem:[%s1267] sm:$0xff]
        %v1269 = vld [vmem:[%s1267 + $0x8] sm:$0xff]
        %v1270 = vld [vmem:[%s1267 + $0x10] sm:$0xff]
        %v1271 = vld [vmem:[%s1267 + $0x18] sm:$0xff]
        %v1272 = vpack.c.bf16 %v1264, %v1264
        %v1273 = vld [vmem:[#allocation5] sm:$0xff]
        %v1274 = vld [vmem:[#allocation5 + $0x8] sm:$0xff]
        %v1275 = vld [vmem:[#allocation5 + $0x10] sm:$0xff]
        %v1276 = vld [vmem:[#allocation5 + $0x18] sm:$0xff]
        %v1277 = vld [vmem:[#allocation5 + $0x20] sm:$0xff]
        %v1278 = vld [vmem:[#allocation5 + $0x28] sm:$0xff]
        %v1279 = vld [vmem:[#allocation5 + $0x30] sm:$0xff]
        %v1280 = vld [vmem:[#allocation5 + $0x38] sm:$0xff]
        %v1281 = vld [vmem:[#allocation5 + $0x40] sm:$0xff]
        %v1282 = vld [vmem:[#allocation5 + $0x48] sm:$0xff]
        %v1283 = vld [vmem:[#allocation5 + $0x50] sm:$0xff]
        %v1284 = vld [vmem:[#allocation5 + $0x58] sm:$0xff]
        %v1285 = vld [vmem:[#allocation5 + $0x60] sm:$0xff]
        %v1286 = vld [vmem:[#allocation5 + $0x68] sm:$0xff]
        %v1287 = vld [vmem:[#allocation5 + $0x70] sm:$0xff]
        %v1288 = vld [vmem:[#allocation5 + $0x78] sm:$0xff]
        %v1289 = vld [vmem:[#allocation5 + $0x80] sm:$0xff]
        %v1290 = vld [vmem:[#allocation5 + $0x88] sm:$0xff]
        %v1291 = vld [vmem:[#allocation5 + $0x90] sm:$0xff]
        %v1292 = vld [vmem:[#allocation5 + $0x98] sm:$0xff]
        %v1293 = vld [vmem:[#allocation5 + $0xa0] sm:$0xff]
        %v1294 = vld [vmem:[#allocation5 + $0xa8] sm:$0xff]
        %v1295 = vld [vmem:[#allocation5 + $0xb0] sm:$0xff]
        %v1296 = vld [vmem:[#allocation5 + $0xb8] sm:$0xff]
        %v1297 = vld [vmem:[#allocation5 + $0xc0] sm:$0xff]
        %v1298 = vld [vmem:[#allocation5 + $0xc8] sm:$0xff]
        %v1299 = vld [vmem:[#allocation5 + $0xd0] sm:$0xff]
        %v1300 = vld [vmem:[#allocation5 + $0xd8] sm:$0xff]
        %v1301 = vld [vmem:[#allocation5 + $0xe0] sm:$0xff]
        %v1302 = vld [vmem:[#allocation5 + $0xe8] sm:$0xff]
        %v1303 = vld [vmem:[#allocation5 + $0xf0] sm:$0xff]
        %v1304 = vld [vmem:[#allocation5 + $0xf8] sm:$0xff]
        %v1337 = vunpack.c.l.b16 %v1273
        %v1338 = vunpack.c.h.b16 %v1273
        %v1339 = vunpack.c.l.b16 %v1274
        %v1340 = vunpack.c.h.b16 %v1274
        %v1341 = vunpack.c.l.b16 %v1275
        %v1342 = vunpack.c.h.b16 %v1275
        %v1343 = vunpack.c.l.b16 %v1276
        %v1344 = vunpack.c.h.b16 %v1276
        %v1345 = vunpack.c.l.b16 %v1277
        %v1346 = vunpack.c.h.b16 %v1277
        %v1347 = vunpack.c.l.b16 %v1278
        %v1348 = vunpack.c.h.b16 %v1278
        %v1349 = vunpack.c.l.b16 %v1279
        %v1350 = vunpack.c.h.b16 %v1279
        %v1351 = vunpack.c.l.b16 %v1280
        %v1352 = vunpack.c.h.b16 %v1280
        %v1353 = vunpack.c.l.b16 %v1281
        %v1354 = vunpack.c.h.b16 %v1281
        %v1355 = vunpack.c.l.b16 %v1282
        %v1356 = vunpack.c.h.b16 %v1282
        %v1357 = vunpack.c.l.b16 %v1283
        %v1358 = vunpack.c.h.b16 %v1283
        %v1359 = vunpack.c.l.b16 %v1284
        %v1360 = vunpack.c.h.b16 %v1284
        %v1361 = vunpack.c.l.b16 %v1285
        %v1362 = vunpack.c.h.b16 %v1285
        %v1363 = vunpack.c.l.b16 %v1286
        %v1364 = vunpack.c.h.b16 %v1286
        %v1365 = vunpack.c.l.b16 %v1287
        %v1366 = vunpack.c.h.b16 %v1287
        %v1367 = vunpack.c.l.b16 %v1288
        %v1368 = vunpack.c.h.b16 %v1288
        %v1369 = vunpack.c.l.b16 %v1289
        %v1370 = vunpack.c.h.b16 %v1289
        %v1371 = vunpack.c.l.b16 %v1290
        %v1372 = vunpack.c.h.b16 %v1290
        %v1373 = vunpack.c.l.b16 %v1291
        %v1374 = vunpack.c.h.b16 %v1291
        %v1375 = vunpack.c.l.b16 %v1292
        %v1376 = vunpack.c.h.b16 %v1292
        %v1377 = vunpack.c.l.b16 %v1293
        %v1378 = vunpack.c.h.b16 %v1293
        %v1379 = vunpack.c.l.b16 %v1294
        %v1380 = vunpack.c.h.b16 %v1294
        %v1381 = vunpack.c.l.b16 %v1295
        %v1382 = vunpack.c.h.b16 %v1295
        %v1383 = vunpack.c.l.b16 %v1296
        %v1384 = vunpack.c.h.b16 %v1296
        %v1385 = vunpack.c.l.b16 %v1297
        %v1386 = vunpack.c.h.b16 %v1297
        %v1387 = vunpack.c.l.b16 %v1298
        %v1388 = vunpack.c.h.b16 %v1298
        %v1389 = vunpack.c.l.b16 %v1299
        %v1390 = vunpack.c.h.b16 %v1299
        %v1391 = vunpack.c.l.b16 %v1300
        %v1392 = vunpack.c.h.b16 %v1300
        %v1393 = vunpack.c.l.b16 %v1301
        %v1394 = vunpack.c.h.b16 %v1301
        %v1395 = vunpack.c.l.b16 %v1302
        %v1396 = vunpack.c.h.b16 %v1302
        %v1397 = vunpack.c.l.b16 %v1303
        %v1398 = vunpack.c.h.b16 %v1303
        %v1399 = vunpack.c.l.b16 %v1304
        %v1400 = vunpack.c.h.b16 %v1304
        %v1401 = vpack.c.b16 %v1341, %v1337
        %v1402 = vpack.c.b16 %v1342, %v1338
        %v1403 = vpack.c.b16 %v1343, %v1339
        %v1404 = vpack.c.b16 %v1344, %v1340
        %v1405 = vpack.c.b16 %v1349, %v1345
        %v1406 = vpack.c.b16 %v1350, %v1346
        %v1407 = vpack.c.b16 %v1351, %v1347
        %v1408 = vpack.c.b16 %v1352, %v1348
        %v1409 = vpack.c.b16 %v1357, %v1353
        %v1410 = vpack.c.b16 %v1358, %v1354
        %v1411 = vpack.c.b16 %v1359, %v1355
        %v1412 = vpack.c.b16 %v1360, %v1356
        %v1413 = vpack.c.b16 %v1365, %v1361
        %v1414 = vpack.c.b16 %v1366, %v1362
        %v1415 = vpack.c.b16 %v1367, %v1363
        %v1416 = vpack.c.b16 %v1368, %v1364
        %v1417 = vpack.c.b16 %v1373, %v1369
        %v1418 = vpack.c.b16 %v1374, %v1370
        %v1419 = vpack.c.b16 %v1375, %v1371
        %v1420 = vpack.c.b16 %v1376, %v1372
        %v1421 = vpack.c.b16 %v1381, %v1377
        %v1422 = vpack.c.b16 %v1382, %v1378
        %v1423 = vpack.c.b16 %v1383, %v1379
        %v1424 = vpack.c.b16 %v1384, %v1380
        %v1425 = vpack.c.b16 %v1389, %v1385
        %v1426 = vpack.c.b16 %v1390, %v1386
        %v1427 = vpack.c.b16 %v1391, %v1387
        %v1428 = vpack.c.b16 %v1392, %v1388
        %v1429 = vpack.c.b16 %v1397, %v1393
        %v1430 = vpack.c.b16 %v1398, %v1394
        %v1431 = vpack.c.b16 %v1399, %v1395
        %v1432 = vpack.c.b16 %v1400, %v1396
        %1465 = vmatprep.subr.bf16.mxu0 %v1402
        %1466 = vmatpush1.bf16.msra.mxu0 %v1401
        %1467 = vmatprep.subr.bf16.mxu0 %v1406
        %1468 = vmatpush1.bf16.msra.mxu0 %v1405
        %1469 = vmatprep.subr.bf16.mxu0 %v1410
        %1470 = vmatpush1.bf16.msra.mxu0 %v1409
        %1471 = vmatprep.subr.bf16.mxu0 %v1414
        %1472 = vmatpush1.bf16.msra.mxu0 %v1413
        %1473 = vmatprep.subr.bf16.mxu0 %v1418
        %1474 = vmatpush1.bf16.msra.mxu0 %v1417
        %1475 = vmatprep.subr.bf16.mxu0 %v1422
        %1476 = vmatpush1.bf16.msra.mxu0 %v1421
        %1477 = vmatprep.subr.bf16.mxu0 %v1426
        %1478 = vmatpush1.bf16.msra.mxu0 %v1425
        %1479 = vmatprep.subr.bf16.mxu0 %v1430
        %1480 = vmatpush1.bf16.msra.mxu0 %v1429
        %1481 = vmatprep.subr.bf16.mxu0 0
        %1482 = vmatpush1.bf16.msra.mxu0 0
        %1483 = vmatprep.subr.bf16.mxu0 0
        %1484 = vmatpush1.bf16.msra.mxu0 0
        %1485 = vmatprep.subr.bf16.mxu0 0
        %1486 = vmatpush1.bf16.msra.mxu0 0
        %1487 = vmatprep.subr.bf16.mxu0 0
        %1488 = vmatpush1.bf16.msra.mxu0 0
        %1489 = vmatprep.subr.bf16.mxu0 0
        %1490 = vmatpush1.bf16.msra.mxu0 0
        %1491 = vmatprep.subr.bf16.mxu0 0
        %1492 = vmatpush1.bf16.msra.mxu0 0
        %1493 = vmatprep.subr.bf16.mxu0 0
        %1494 = vmatpush1.bf16.msra.mxu0 0
        %1495 = vmatprep.subr.bf16.mxu0 0
        %1496 = vmatpush1.bf16.msra.mxu0 0
        %1497 = vmatprep.mubr.bf16.mxu0 0
        %1498 = vmatmul.mubr.bf16.gmra.mrb[0].mxu0 %v1272
        %v1499 = vpop.f32.mrb[0].mxu0
        %v1500 = vadd.f32 0.0, %v1499
        %v1501 = vpop.f32.mrb[0].mxu0
        %v1502 = vadd.f32 0.0, %v1501
        %v1503 = vpop.f32.mrb[0].mxu0
        %v1504 = vpop.f32.mrb[0].mxu0
        %1505 = vdwg.mxu0
        %1506 = vmatprep.subr.bf16.mxu0 %v1404
        %1507 = vmatpush1.bf16.msra.mxu0 %v1403
        %1508 = vmatprep.subr.bf16.mxu0 %v1408
        %1509 = vmatpush1.bf16.msra.mxu0 %v1407
        %1510 = vmatprep.subr.bf16.mxu0 %v1412
        %1511 = vmatpush1.bf16.msra.mxu0 %v1411
        %1512 = vmatprep.subr.bf16.mxu0 %v1416
        %1513 = vmatpush1.bf16.msra.mxu0 %v1415
        %1514 = vmatprep.subr.bf16.mxu0 %v1420
        %1515 = vmatpush1.bf16.msra.mxu0 %v1419
        %1516 = vmatprep.subr.bf16.mxu0 %v1424
        %1517 = vmatpush1.bf16.msra.mxu0 %v1423
        %1518 = vmatprep.subr.bf16.mxu0 %v1428
        %1519 = vmatpush1.bf16.msra.mxu0 %v1427
        %1520 = vmatprep.subr.bf16.mxu0 %v1432
        %1521 = vmatpush1.bf16.msra.mxu0 %v1431
        %1522 = vmatprep.subr.bf16.mxu0 0
        %1523 = vmatpush1.bf16.msra.mxu0 0
        %1524 = vmatprep.subr.bf16.mxu0 0
        %1525 = vmatpush1.bf16.msra.mxu0 0
        %1526 = vmatprep.subr.bf16.mxu0 0
        %1527 = vmatpush1.bf16.msra.mxu0 0
        %1528 = vmatprep.subr.bf16.mxu0 0
        %1529 = vmatpush1.bf16.msra.mxu0 0
        %1530 = vmatprep.subr.bf16.mxu0 0
        %1531 = vmatpush1.bf16.msra.mxu0 0
        %1532 = vmatprep.subr.bf16.mxu0 0
        %1533 = vmatpush1.bf16.msra.mxu0 0
        %1534 = vmatprep.subr.bf16.mxu0 0
        %1535 = vmatpush1.bf16.msra.mxu0 0
        %1536 = vmatprep.subr.bf16.mxu0 0
        %1537 = vmatpush1.bf16.msra.mxu0 0
        %1538 = vmatprep.mubr.bf16.mxu0 0
        %1539 = vmatmul.mubr.bf16.gmra.mrb[0].mxu0 %v1272
        %v1540 = vpop.f32.mrb[0].mxu0
        %v1541 = vadd.f32 0.0, %v1540
        %v1542 = vpop.f32.mrb[0].mxu0
        %v1543 = vadd.f32 0.0, %v1542
        %v1544 = vpop.f32.mrb[0].mxu0
        %v1545 = vpop.f32.mrb[0].mxu0
        %1546 = vdwg.mxu0
        %v1547 = vadd.f32 %v1268, %v1500
        %v1548 = vadd.f32 %v1269, %v1502
        %v1549 = vadd.f32 %v1270, %v1541
        %v1550 = vadd.f32 %v1271, %v1543
        %v1551 = vxor.u32 %v1547, 2147483648
        %v1552 = vmul.f32 %v1551, 1.442695
        %v1553 = vpow.pop %v1552
        %v1554 = vadd.f32 %v1553, 1.0
        %v1555 = vrcp.pop %v1554
        %v1556 = vmul.f32 1.0, %v1555
        %v1557 = vxor.u32 %v1548, 2147483648
        %v1558 = vmul.f32 %v1557, 1.442695
        %v1559 = vpow.pop %v1558
        %v1560 = vadd.f32 %v1559, 1.0
        %v1561 = vrcp.pop %v1560
        %v1562 = vmul.f32 1.0, %v1561
        %v1563 = vtanh.pop %v1549
        %v1564 = vmul.f32 %v1562, %v1256
        %v1565 = vmul.f32 %v1556, %v1563
        %v1566 = vadd.f32 %v1564, %v1565
        %v1567 = vxor.u32 %v1550, 2147483648
        %v1568 = vmul.f32 %v1567, 1.442695
        %v1569 = vpow.pop %v1568
        %v1570 = vadd.f32 %v1569, 1.0
        %v1571 = vrcp.pop %v1570
        %v1572 = vmul.f32 1.0, %v1571
        %v1573 = vtanh.pop %v1566
        %v1574 = vmul.f32 %v1572, %v1573
        %s1575 = scalar_lea.vmem %s206, 24 [#allocation8]
        %1576 = vst [vmem:[%s1575] sm:$0xff] %v1574
        %1577 = vst [vmem:[#allocation2] sm:$0xff] %v1574
        %1578 = vst [vmem:[#allocation3] sm:$0xff] %v1566
        %s1579 = sand.u32 %s116, 1
        %s1580 = scalar_lea.sflag [#allocation7], %s1579
        %s1581 = sand.u32 %s116, 1
        %s1582 = smul.addr %s1581, 32
        %s1583 = scalar_lea.vmem [#allocation8], %s1582
        // Predicated region
        $region45: #{tpu_custom_call.1} parent=35 // pred_check
          %p1584 = pneg %p126
        $region46: #{tpu_custom_call.1} parent=35 // pred_check_branch
          %1586 = sbr.rel (%p1584) target = $region48
        $region47: #{tpu_custom_call.1} parent=35 // pred_region
          %s1587 = smul.u32 4, %s19
          %s1589 = ssub.s32 512, 512
          %1590 = vsyncadd %s1580, %s1589
          %s1591 = smul.addr %s1587, 128
          %s1592 = scalar_lea.hbm %s4, %s1591
          %s1593 = sshll.u32 %s1583, 4
          %s1594 = int_to_ptr.vmem [resolvable:$true] %s1593
          %1599 = dma.vmem_to_hbm [thread:$0]  %s1594, 512, %s1592, %s1580, 128, 128, 8
        $region48: #{tpu_custom_call.1} parent=35 // pred_fallthru
          _
      $region36: #{tpu_custom_call.1} parent=5 // pred_fallthru
        _
      %p1600 = scmp.le.s32.totalorder 2, %s14
      // Predicated region
      $region49: #{tpu_custom_call.1} parent=5 // pred_check
        %p1601 = pneg %p1600
      $region50: #{tpu_custom_call.1} parent=5 // pred_check_branch
        %1603 = sbr.rel (%p1601) target = $region52
      $region51: #{tpu_custom_call.1} parent=5 // pred_region
        %s1604 = ssub.s32 %s14, 2
        // Predicated region
        $region53: #{tpu_custom_call.1} parent=51 // pred_check
          %p1605 = pneg %p132
        $region54: #{tpu_custom_call.1} parent=51 // pred_check_branch
          %1607 = sbr.rel (%p1605) target = $region56
        $region55: #{tpu_custom_call.1} parent=51 // pred_region
          %s1608 = sand.u32 %s117, 1
          %s1609 = scalar_lea.sflag [#allocation7], %s1608
          %s1610 = sand.u32 %s117, 1
          %s1611 = smul.addr %s1610, 32
          %s1612 = scalar_lea.vmem [#allocation8], %s1611
          %1613 = dma.done %s1609, 512
        $region56: #{tpu_custom_call.1} parent=51 // pred_fallthru
          _
      $region52: #{tpu_custom_call.1} parent=5 // pred_fallthru
        _
    $region6: #{tpu_custom_call.1} parent=1 // loop_footer
      %s18 = sadd.s32 1, %s14
    $region7: #{tpu_custom_call.1} parent=1 // loop_footer_branch
      %13 = sbr.rel target = $region3
    $region8: #{tpu_custom_call.1} parent=1 // loop_exit
      _
    %1614 = vsyncpa [#allocation6], 1
    %s1615 = scalar_lea.sflag [#allocation6], 1
    %1616 = vsyncpa %s1615, 1
    %1617 = vsyncpa [#allocation7], 1
    %s1618 = scalar_lea.sflag [#allocation7], 1
    %1619 = vsyncpa %s1618, 1

</llo_original>
